<compile_context>
chip_gen: v5e
topology: v5e:2x2
jax: 0.10.0
libtpu: 0.0.40
codegen_flags: <defaults>
</compile_context>

<pallas_src>
import functools

import jax
import jax.numpy as jnp
from jax import lax
from jax.experimental import pallas as pl
from jax.experimental.pallas import tpu as pltpu


# ----------------------------- kernel helpers -------------------------------

def _layer_norm(x, gamma, beta, eps=1e-5):
    # LayerNorm over last dim (matches nn.LayerNorm(num_output), eps=1e-5).
    mean = jnp.mean(x, axis=-1, keepdims=True)
    var = jnp.mean((x - mean) ** 2, axis=-1, keepdims=True)
    inv = lax.rsqrt(var + eps)
    return (x - mean) * inv * gamma + beta


def _softplus(x):
    # torch F.softplus(beta=1, threshold=20):  x for x>20 else log(1+exp(x)).
    # max(x,0) + log(1+exp(-|x|)) is the same function, overflow-safe, and
    # returns exactly x for x > ~17 (so the threshold branch is respected).
    return jnp.maximum(x, 0.0) + jnp.log(1.0 + jnp.exp(-jnp.abs(x)))


# ----------------------------- fused Pallas kernel ---------------------------

def fused_encoder_kernel(*refs, layer_meta, num_heads, d_qk, d_v,
                         temp, leakiness):
    """Whole encoder stack on the full (N, F_in) tile, weights VMEM-resident.

    refs = (x_ref, *param_refs_in_layer_order, out_ref)
    Per-layer param order:
      wqkv, wo, [wr, br if residual projection], gamma_a, beta_a,
      w1, b1, w2, b2, gamma_f, beta_f
    """
    x_ref = refs[0]
    out_ref = refs[-1]
    params = refs[1:-1]

    x = x_ref[...].astype(jnp.float32)                      # (N, F_in)
    inv_temp = 1.0 / temp
    idx = 0

    for has_residual_proj in layer_meta:                    # static unroll
        # ---------------- MultiHeadAttention ----------------
        wqkv = params[idx][...]; idx += 1                   # (F_in, H*(2dqk+dv))
        wo = params[idx][...]; idx += 1                     # (H*dv, num_hidden)
        if has_residual_proj:
            wr = params[idx][...]; idx += 1                 # (F_in, num_hidden)
            br = params[idx][...]; idx += 1                 # (1, num_hidden)
            residual = jnp.dot(x, wr,
                               preferred_element_type=jnp.float32) + br
        else:
            residual = x                                    # nn.Identity
        gamma_a = params[idx][...]; idx += 1
        beta_a = params[idx][...]; idx += 1

        # One lane-dense projection for all heads' Q, K, V.
        qkv = jnp.dot(x, wqkv, preferred_element_type=jnp.float32)
        q_all = qkv[:, : num_heads * d_qk] * inv_temp       # fold 1/T into Q
        k_all = qkv[:, num_heads * d_qk: 2 * num_heads * d_qk]
        v_all = qkv[:, 2 * num_heads * d_qk:]

        head_outs = []
        for h in range(num_heads):                          # static unroll
            q_h = q_all[:, h * d_qk:(h + 1) * d_qk]         # (N, d_qk)
            k_h = k_all[:, h * d_qk:(h + 1) * d_qk]         # (N, d_qk)
            v_h = v_all[:, h * d_v:(h + 1) * d_v]           # (N, d_v)

            # scores s[i,j] = <q_i/T, k_j>  (no explicit k.T)
            s = lax.dot_general(q_h, k_h, (((1,), (1,)), ((), ())),
                                preferred_element_type=jnp.float32)
            # softmax over the key axis (torch dim=1)
            s = s - jnp.max(s, axis=-1, keepdims=True)
            p = jnp.exp(s)
            denom = jnp.sum(p, axis=-1, keepdims=True)
            p = p * pl.reciprocal(denom, approx=True)

            head_outs.append(jnp.dot(p, v_h,
                                     preferred_element_type=jnp.float32))

        o_cat = jnp.concatenate(head_outs, axis=-1)         # (N, H*d_v)
        out = jnp.dot(o_cat, wo,
                      preferred_element_type=jnp.float32) + residual
        # dropout: eval-mode identity
        x = _layer_norm(out, gamma_a, beta_a)               # (N, num_hidden)

        # ---------------- PositionWiseFFN ----------------
        w1 = params[idx][...]; idx += 1
        b1 = params[idx][...]; idx += 1
        w2 = params[idx][...]; idx += 1
        b2 = params[idx][...]; idx += 1
        gamma_f = params[idx][...]; idx += 1
        beta_f = params[idx][...]; idx += 1

        h1 = jnp.dot(x, w1, preferred_element_type=jnp.float32) + b1
        h1 = jnp.where(h1 >= 0.0, h1, leakiness * h1)       # LeakyReLU
        out = jnp.dot(h1, w2, preferred_element_type=jnp.float32) + b2
        # dropout: eval-mode identity
        out = out + x
        x = _layer_norm(out, gamma_f, beta_f)

    out_ref[...] = _softplus(x).astype(out_ref.dtype)


# ----------------------------- wrapper ---------------------------------------

def transformer_encoder_forward(x, flat_params, layer_meta, *, num_hidden,
                                num_heads, d_qk, d_v, leakiness):
    n = x.shape[0]
    temp = float(num_hidden) ** 0.5                         # T = num_output ** 0.5
    kernel = functools.partial(
        fused_encoder_kernel, layer_meta=tuple(layer_meta),
        num_heads=num_heads, d_qk=d_qk, d_v=d_v, temp=temp,
        leakiness=leakiness)
    vmem = pl.BlockSpec(memory_space=pltpu.MemorySpace.VMEM)
    return pl.pallas_call(
        kernel,
        out_shape=jax.ShapeDtypeStruct((n, num_hidden), jnp.float32),
        in_specs=[vmem] * (1 + len(flat_params)),
        out_specs=vmem,
    )(x, *flat_params)


# ----------------------------- parameter init --------------------------------

def init_params(key, num_input, num_hidden, num_layers, d_qk, d_v, num_heads):
    """Deterministic synthetic parameters, packed for the fused kernel."""
    flat = []
    meta = []
    fin = num_input
    for layer in range(num_layers):
        k = jax.random.fold_in(key, layer)
        ks = jax.random.split(k, 8)

        def rnd(kk, shape, fan_in):
            return (jax.random.normal(kk, shape, jnp.float32)
                    / jnp.sqrt(jnp.float32(fan_in)))

        qkv_width = num_heads * (2 * d_qk + d_v)
        wqkv = rnd(ks[0], (fin, qkv_width), fin)            # packed Wq|Wk|Wv
        wo = rnd(ks[1], (num_heads * d_v, num_hidden), num_heads * d_v)

        has_res_proj = (fin != num_hidden)
        flat += [wqkv, wo]
        if has_res_proj:
            # nn.Linear residual (with bias)
            flat += [rnd(ks[2], (fin, num_hidden), fin),
                     rnd(ks[3], (1, num_hidden), fin)]
        # MHA layernorm
        flat += [jnp.ones((1, num_hidden), jnp.float32),
                 jnp.zeros((1, num_hidden), jnp.float32)]
        # FFN
        flat += [rnd(ks[4], (num_hidden, num_hidden), num_hidden),
                 rnd(ks[5], (1, num_hidden), num_hidden),
                 rnd(ks[6], (num_hidden, num_hidden), num_hidden),
                 rnd(ks[7], (1, num_hidden), num_hidden),
                 jnp.ones((1, num_hidden), jnp.float32),
                 jnp.zeros((1, num_hidden), jnp.float32)]

        meta.append(has_res_proj)
        fin = num_hidden
    return flat, tuple(meta)


# ----------------------------- main -------------------------------------------

if __name__ == "__main__":
    # Small shapes consistent with (N, F_in) -> (N, num_hidden) semantics.
    N, NUM_INPUT = 16, 16
    NUM_HIDDEN, NUM_LAYERS = 32, 2
    D_QK, D_V, NUM_HEADS = 16, 16, 4
    LEAKINESS = 0.0

    key = jax.random.PRNGKey(0)
    k_x, k_p = jax.random.split(key)
    x = jax.random.normal(k_x, (N, NUM_INPUT), jnp.float32)
    flat_params, layer_meta = init_params(
        k_p, NUM_INPUT, NUM_HIDDEN, NUM_LAYERS, D_QK, D_V, NUM_HEADS)

    out = transformer_encoder_forward(
        x, flat_params, layer_meta, num_hidden=NUM_HIDDEN,
        num_heads=NUM_HEADS, d_qk=D_QK, d_v=D_V, leakiness=LEAKINESS)
    out = jax.block_until_ready(out)

    assert out.shape == (N, NUM_HIDDEN)
    assert bool(jnp.all(jnp.isfinite(out)))
    assert bool(jnp.all(out >= 0.0))  # softplus output is non-negative
    print("KERNEL_OK")
</pallas_src>

<mosaic_0001>
module attributes {stable_mosaic.version = 11 : i64} {
  func.func @fused_encoder_kernel(%arg0: memref<16x16xf32, #tpu.memory_space<vmem>>, %arg1: memref<16x192xf32, #tpu.memory_space<vmem>>, %arg2: memref<64x32xf32, #tpu.memory_space<vmem>>, %arg3: memref<16x32xf32, #tpu.memory_space<vmem>>, %arg4: memref<1x32xf32, #tpu.memory_space<vmem>>, %arg5: memref<1x32xf32, #tpu.memory_space<vmem>>, %arg6: memref<1x32xf32, #tpu.memory_space<vmem>>, %arg7: memref<32x32xf32, #tpu.memory_space<vmem>>, %arg8: memref<1x32xf32, #tpu.memory_space<vmem>>, %arg9: memref<32x32xf32, #tpu.memory_space<vmem>>, %arg10: memref<1x32xf32, #tpu.memory_space<vmem>>, %arg11: memref<1x32xf32, #tpu.memory_space<vmem>>, %arg12: memref<1x32xf32, #tpu.memory_space<vmem>>, %arg13: memref<32x192xf32, #tpu.memory_space<vmem>>, %arg14: memref<64x32xf32, #tpu.memory_space<vmem>>, %arg15: memref<1x32xf32, #tpu.memory_space<vmem>>, %arg16: memref<1x32xf32, #tpu.memory_space<vmem>>, %arg17: memref<32x32xf32, #tpu.memory_space<vmem>>, %arg18: memref<1x32xf32, #tpu.memory_space<vmem>>, %arg19: memref<32x32xf32, #tpu.memory_space<vmem>>, %arg20: memref<1x32xf32, #tpu.memory_space<vmem>>, %arg21: memref<1x32xf32, #tpu.memory_space<vmem>>, %arg22: memref<1x32xf32, #tpu.memory_space<vmem>>, %arg23: memref<16x32xf32, #tpu.memory_space<vmem>>) attributes {dimension_semantics = [], scalar_prefetch = 0 : i64, scratch_operands = 0 : i64, tpu.core_type = #tpu.core_type<tc>} {
    %c0 = arith.constant 0 : index
    %c0_0 = arith.constant 0 : index
    %0 = vector.load %arg0[%c0, %c0_0] : memref<16x16xf32, #tpu.memory_space<vmem>>, vector<16x16xf32>
    %c0_1 = arith.constant 0 : index
    %c0_2 = arith.constant 0 : index
    %1 = vector.load %arg1[%c0_1, %c0_2] : memref<16x192xf32, #tpu.memory_space<vmem>>, vector<16x192xf32>
    %c0_3 = arith.constant 0 : index
    %c0_4 = arith.constant 0 : index
    %2 = vector.load %arg2[%c0_3, %c0_4] : memref<64x32xf32, #tpu.memory_space<vmem>>, vector<64x32xf32>
    %c0_5 = arith.constant 0 : index
    %c0_6 = arith.constant 0 : index
    %3 = vector.load %arg3[%c0_5, %c0_6] : memref<16x32xf32, #tpu.memory_space<vmem>>, vector<16x32xf32>
    %c0_7 = arith.constant 0 : index
    %c0_8 = arith.constant 0 : index
    %4 = vector.load %arg4[%c0_7, %c0_8] : memref<1x32xf32, #tpu.memory_space<vmem>>, vector<1x32xf32>
    %cst = arith.constant dense<0.000000e+00> : vector<16x32xf32>
    %5 = tpu.matmul %0, %3, %cst {dimension_numbers = #tpu.dot_dimension_numbers<[1], [0], [0], [1], [0, 0, 1, 1], [], []>} : vector<16x16xf32>, vector<16x32xf32>, vector<16x32xf32> -> vector<16x32xf32>
    %6 = vector.broadcast %4 : vector<1x32xf32> to vector<16x32xf32>
    %7 = arith.addf %5, %6 : vector<16x32xf32>
    %c0_9 = arith.constant 0 : index
    %c0_10 = arith.constant 0 : index
    %8 = vector.load %arg5[%c0_9, %c0_10] : memref<1x32xf32, #tpu.memory_space<vmem>>, vector<1x32xf32>
    %c0_11 = arith.constant 0 : index
    %c0_12 = arith.constant 0 : index
    %9 = vector.load %arg6[%c0_11, %c0_12] : memref<1x32xf32, #tpu.memory_space<vmem>>, vector<1x32xf32>
    %cst_13 = arith.constant dense<0.000000e+00> : vector<16x192xf32>
    %10 = tpu.matmul %0, %1, %cst_13 {dimension_numbers = #tpu.dot_dimension_numbers<[1], [0], [0], [1], [0, 0, 1, 1], [], []>} : vector<16x16xf32>, vector<16x192xf32>, vector<16x192xf32> -> vector<16x192xf32>
    %11 = vector.extract_strided_slice %10 {offsets = [0, 0], sizes = [16, 64], strides = [1, 1]} : vector<16x192xf32> to vector<16x64xf32>
    %cst_14 = arith.constant 0.176776692 : f32
    %12 = vector.broadcast %cst_14 : f32 to vector<16x64xf32>
    %13 = arith.mulf %11, %12 : vector<16x64xf32>
    %14 = vector.extract_strided_slice %10 {offsets = [0, 64], sizes = [16, 64], strides = [1, 1]} : vector<16x192xf32> to vector<16x64xf32>
    %15 = vector.extract_strided_slice %10 {offsets = [0, 128], sizes = [16, 64], strides = [1, 1]} : vector<16x192xf32> to vector<16x64xf32>
    %16 = vector.extract_strided_slice %13 {offsets = [0, 0], sizes = [16, 16], strides = [1, 1]} : vector<16x64xf32> to vector<16x16xf32>
    %17 = vector.extract_strided_slice %14 {offsets = [0, 0], sizes = [16, 16], strides = [1, 1]} : vector<16x64xf32> to vector<16x16xf32>
    %18 = vector.extract_strided_slice %15 {offsets = [0, 0], sizes = [16, 16], strides = [1, 1]} : vector<16x64xf32> to vector<16x16xf32>
    %cst_15 = arith.constant dense<0.000000e+00> : vector<16x16xf32>
    %19 = tpu.matmul %16, %17, %cst_15 {dimension_numbers = #tpu.dot_dimension_numbers<[1], [1], [0], [0], [0, 0, 1, 0], [], []>} : vector<16x16xf32>, vector<16x16xf32>, vector<16x16xf32> -> vector<16x16xf32>
    %cst_16 = arith.constant dense<0xFF800000> : vector<16xf32>
    %20 = vector.multi_reduction <maximumf>, %19, %cst_16 [1] : vector<16x16xf32> to vector<16xf32>
    %21 = vector.shape_cast %20 : vector<16xf32> to vector<16x1xf32>
    %22 = vector.broadcast %21 : vector<16x1xf32> to vector<16x16xf32>
    %23 = arith.subf %19, %22 : vector<16x16xf32>
    %24 = math.exp %23 : vector<16x16xf32>
    %cst_17 = arith.constant dense<0.000000e+00> : vector<16xf32>
    %25 = vector.multi_reduction <add>, %24, %cst_17 [1] : vector<16x16xf32> to vector<16xf32>
    %26 = vector.shape_cast %25 : vector<16xf32> to vector<16x1xf32>
    %27 = tpu.reciprocal %26 {approx = true} : vector<16x1xf32> -> vector<16x1xf32>
    %28 = vector.broadcast %27 : vector<16x1xf32> to vector<16x16xf32>
    %29 = arith.mulf %24, %28 : vector<16x16xf32>
    %cst_18 = arith.constant dense<0.000000e+00> : vector<16x16xf32>
    %30 = tpu.matmul %29, %18, %cst_18 {dimension_numbers = #tpu.dot_dimension_numbers<[1], [0], [0], [1], [0, 0, 1, 1], [], []>} : vector<16x16xf32>, vector<16x16xf32>, vector<16x16xf32> -> vector<16x16xf32>
    %31 = vector.extract_strided_slice %13 {offsets = [0, 16], sizes = [16, 16], strides = [1, 1]} : vector<16x64xf32> to vector<16x16xf32>
    %32 = vector.extract_strided_slice %14 {offsets = [0, 16], sizes = [16, 16], strides = [1, 1]} : vector<16x64xf32> to vector<16x16xf32>
    %33 = vector.extract_strided_slice %15 {offsets = [0, 16], sizes = [16, 16], strides = [1, 1]} : vector<16x64xf32> to vector<16x16xf32>
    %cst_19 = arith.constant dense<0.000000e+00> : vector<16x16xf32>
    %34 = tpu.matmul %31, %32, %cst_19 {dimension_numbers = #tpu.dot_dimension_numbers<[1], [1], [0], [0], [0, 0, 1, 0], [], []>} : vector<16x16xf32>, vector<16x16xf32>, vector<16x16xf32> -> vector<16x16xf32>
    %cst_20 = arith.constant dense<0xFF800000> : vector<16xf32>
    %35 = vector.multi_reduction <maximumf>, %34, %cst_20 [1] : vector<16x16xf32> to vector<16xf32>
    %36 = vector.shape_cast %35 : vector<16xf32> to vector<16x1xf32>
    %37 = vector.broadcast %36 : vector<16x1xf32> to vector<16x16xf32>
    %38 = arith.subf %34, %37 : vector<16x16xf32>
    %39 = math.exp %38 : vector<16x16xf32>
    %cst_21 = arith.constant dense<0.000000e+00> : vector<16xf32>
    %40 = vector.multi_reduction <add>, %39, %cst_21 [1] : vector<16x16xf32> to vector<16xf32>
    %41 = vector.shape_cast %40 : vector<16xf32> to vector<16x1xf32>
    %42 = tpu.reciprocal %41 {approx = true} : vector<16x1xf32> -> vector<16x1xf32>
    %43 = vector.broadcast %42 : vector<16x1xf32> to vector<16x16xf32>
    %44 = arith.mulf %39, %43 : vector<16x16xf32>
    %cst_22 = arith.constant dense<0.000000e+00> : vector<16x16xf32>
    %45 = tpu.matmul %44, %33, %cst_22 {dimension_numbers = #tpu.dot_dimension_numbers<[1], [0], [0], [1], [0, 0, 1, 1], [], []>} : vector<16x16xf32>, vector<16x16xf32>, vector<16x16xf32> -> vector<16x16xf32>
    %46 = vector.extract_strided_slice %13 {offsets = [0, 32], sizes = [16, 16], strides = [1, 1]} : vector<16x64xf32> to vector<16x16xf32>
    %47 = vector.extract_strided_slice %14 {offsets = [0, 32], sizes = [16, 16], strides = [1, 1]} : vector<16x64xf32> to vector<16x16xf32>
    %48 = vector.extract_strided_slice %15 {offsets = [0, 32], sizes = [16, 16], strides = [1, 1]} : vector<16x64xf32> to vector<16x16xf32>
    %cst_23 = arith.constant dense<0.000000e+00> : vector<16x16xf32>
    %49 = tpu.matmul %46, %47, %cst_23 {dimension_numbers = #tpu.dot_dimension_numbers<[1], [1], [0], [0], [0, 0, 1, 0], [], []>} : vector<16x16xf32>, vector<16x16xf32>, vector<16x16xf32> -> vector<16x16xf32>
    %cst_24 = arith.constant dense<0xFF800000> : vector<16xf32>
    %50 = vector.multi_reduction <maximumf>, %49, %cst_24 [1] : vector<16x16xf32> to vector<16xf32>
    %51 = vector.shape_cast %50 : vector<16xf32> to vector<16x1xf32>
    %52 = vector.broadcast %51 : vector<16x1xf32> to vector<16x16xf32>
    %53 = arith.subf %49, %52 : vector<16x16xf32>
    %54 = math.exp %53 : vector<16x16xf32>
    %cst_25 = arith.constant dense<0.000000e+00> : vector<16xf32>
    %55 = vector.multi_reduction <add>, %54, %cst_25 [1] : vector<16x16xf32> to vector<16xf32>
    %56 = vector.shape_cast %55 : vector<16xf32> to vector<16x1xf32>
    %57 = tpu.reciprocal %56 {approx = true} : vector<16x1xf32> -> vector<16x1xf32>
    %58 = vector.broadcast %57 : vector<16x1xf32> to vector<16x16xf32>
    %59 = arith.mulf %54, %58 : vector<16x16xf32>
    %cst_26 = arith.constant dense<0.000000e+00> : vector<16x16xf32>
    %60 = tpu.matmul %59, %48, %cst_26 {dimension_numbers = #tpu.dot_dimension_numbers<[1], [0], [0], [1], [0, 0, 1, 1], [], []>} : vector<16x16xf32>, vector<16x16xf32>, vector<16x16xf32> -> vector<16x16xf32>
    %61 = vector.extract_strided_slice %13 {offsets = [0, 48], sizes = [16, 16], strides = [1, 1]} : vector<16x64xf32> to vector<16x16xf32>
    %62 = vector.extract_strided_slice %14 {offsets = [0, 48], sizes = [16, 16], strides = [1, 1]} : vector<16x64xf32> to vector<16x16xf32>
    %63 = vector.extract_strided_slice %15 {offsets = [0, 48], sizes = [16, 16], strides = [1, 1]} : vector<16x64xf32> to vector<16x16xf32>
    %cst_27 = arith.constant dense<0.000000e+00> : vector<16x16xf32>
    %64 = tpu.matmul %61, %62, %cst_27 {dimension_numbers = #tpu.dot_dimension_numbers<[1], [1], [0], [0], [0, 0, 1, 0], [], []>} : vector<16x16xf32>, vector<16x16xf32>, vector<16x16xf32> -> vector<16x16xf32>
    %cst_28 = arith.constant dense<0xFF800000> : vector<16xf32>
    %65 = vector.multi_reduction <maximumf>, %64, %cst_28 [1] : vector<16x16xf32> to vector<16xf32>
    %66 = vector.shape_cast %65 : vector<16xf32> to vector<16x1xf32>
    %67 = vector.broadcast %66 : vector<16x1xf32> to vector<16x16xf32>
    %68 = arith.subf %64, %67 : vector<16x16xf32>
    %69 = math.exp %68 : vector<16x16xf32>
    %cst_29 = arith.constant dense<0.000000e+00> : vector<16xf32>
    %70 = vector.multi_reduction <add>, %69, %cst_29 [1] : vector<16x16xf32> to vector<16xf32>
    %71 = vector.shape_cast %70 : vector<16xf32> to vector<16x1xf32>
    %72 = tpu.reciprocal %71 {approx = true} : vector<16x1xf32> -> vector<16x1xf32>
    %73 = vector.broadcast %72 : vector<16x1xf32> to vector<16x16xf32>
    %74 = arith.mulf %69, %73 : vector<16x16xf32>
    %cst_30 = arith.constant dense<0.000000e+00> : vector<16x16xf32>
    %75 = tpu.matmul %74, %63, %cst_30 {dimension_numbers = #tpu.dot_dimension_numbers<[1], [0], [0], [1], [0, 0, 1, 1], [], []>} : vector<16x16xf32>, vector<16x16xf32>, vector<16x16xf32> -> vector<16x16xf32>
    %76 = tpu.concatenate %30, %45, %60, %75 in 1 : vector<16x16xf32>, vector<16x16xf32>, vector<16x16xf32>, vector<16x16xf32> -> vector<16x64xf32>
    %cst_31 = arith.constant dense<0.000000e+00> : vector<16x32xf32>
    %77 = tpu.matmul %76, %2, %cst_31 {dimension_numbers = #tpu.dot_dimension_numbers<[1], [0], [0], [1], [0, 0, 1, 1], [], []>} : vector<16x64xf32>, vector<64x32xf32>, vector<16x32xf32> -> vector<16x32xf32>
    %78 = arith.addf %77, %7 : vector<16x32xf32>
    %cst_32 = arith.constant dense<0.000000e+00> : vector<16xf32>
    %79 = vector.multi_reduction <add>, %78, %cst_32 [1] : vector<16x32xf32> to vector<16xf32>
    %80 = vector.shape_cast %79 : vector<16xf32> to vector<16x1xf32>
    %cst_33 = arith.constant 3.200000e+01 : f32
    %81 = vector.broadcast %cst_33 : f32 to vector<16x1xf32>
    %82 = arith.divf %80, %81 : vector<16x1xf32>
    %83 = vector.broadcast %82 : vector<16x1xf32> to vector<16x32xf32>
    %84 = arith.subf %78, %83 : vector<16x32xf32>
    %85 = arith.mulf %84, %84 : vector<16x32xf32>
    %cst_34 = arith.constant dense<0.000000e+00> : vector<16xf32>
    %86 = vector.multi_reduction <add>, %85, %cst_34 [1] : vector<16x32xf32> to vector<16xf32>
    %87 = vector.shape_cast %86 : vector<16xf32> to vector<16x1xf32>
    %cst_35 = arith.constant 3.200000e+01 : f32
    %88 = vector.broadcast %cst_35 : f32 to vector<16x1xf32>
    %89 = arith.divf %87, %88 : vector<16x1xf32>
    %cst_36 = arith.constant 9.99999974E-6 : f32
    %90 = vector.broadcast %cst_36 : f32 to vector<16x1xf32>
    %91 = arith.addf %89, %90 : vector<16x1xf32>
    %92 = math.rsqrt %91 : vector<16x1xf32>
    %93 = vector.broadcast %82 : vector<16x1xf32> to vector<16x32xf32>
    %94 = arith.subf %78, %93 : vector<16x32xf32>
    %95 = vector.broadcast %92 : vector<16x1xf32> to vector<16x32xf32>
    %96 = arith.mulf %94, %95 : vector<16x32xf32>
    %97 = vector.broadcast %8 : vector<1x32xf32> to vector<16x32xf32>
    %98 = arith.mulf %96, %97 : vector<16x32xf32>
    %99 = vector.broadcast %9 : vector<1x32xf32> to vector<16x32xf32>
    %100 = arith.addf %98, %99 : vector<16x32xf32>
    %c0_37 = arith.constant 0 : index
    %c0_38 = arith.constant 0 : index
    %101 = vector.load %arg7[%c0_37, %c0_38] : memref<32x32xf32, #tpu.memory_space<vmem>>, vector<32x32xf32>
    %c0_39 = arith.constant 0 : index
    %c0_40 = arith.constant 0 : index
    %102 = vector.load %arg8[%c0_39, %c0_40] : memref<1x32xf32, #tpu.memory_space<vmem>>, vector<1x32xf32>
    %c0_41 = arith.constant 0 : index
    %c0_42 = arith.constant 0 : index
    %103 = vector.load %arg9[%c0_41, %c0_42] : memref<32x32xf32, #tpu.memory_space<vmem>>, vector<32x32xf32>
    %c0_43 = arith.constant 0 : index
    %c0_44 = arith.constant 0 : index
    %104 = vector.load %arg10[%c0_43, %c0_44] : memref<1x32xf32, #tpu.memory_space<vmem>>, vector<1x32xf32>
    %c0_45 = arith.constant 0 : index
    %c0_46 = arith.constant 0 : index
    %105 = vector.load %arg11[%c0_45, %c0_46] : memref<1x32xf32, #tpu.memory_space<vmem>>, vector<1x32xf32>
    %c0_47 = arith.constant 0 : index
    %c0_48 = arith.constant 0 : index
    %106 = vector.load %arg12[%c0_47, %c0_48] : memref<1x32xf32, #tpu.memory_space<vmem>>, vector<1x32xf32>
    %cst_49 = arith.constant dense<0.000000e+00> : vector<16x32xf32>
    %107 = tpu.matmul %100, %101, %cst_49 {dimension_numbers = #tpu.dot_dimension_numbers<[1], [0], [0], [1], [0, 0, 1, 1], [], []>} : vector<16x32xf32>, vector<32x32xf32>, vector<16x32xf32> -> vector<16x32xf32>
    %108 = vector.broadcast %102 : vector<1x32xf32> to vector<16x32xf32>
    %109 = arith.addf %107, %108 : vector<16x32xf32>
    %cst_50 = arith.constant 0.000000e+00 : f32
    %110 = vector.broadcast %cst_50 : f32 to vector<16x32xf32>
    %111 = arith.cmpf oge, %109, %110 : vector<16x32xf32>
    %cst_51 = arith.constant 0.000000e+00 : f32
    %112 = vector.broadcast %cst_51 : f32 to vector<16x32xf32>
    %113 = arith.mulf %112, %109 : vector<16x32xf32>
    %114 = arith.select %111, %109, %113 : vector<16x32xi1>, vector<16x32xf32>
    %cst_52 = arith.constant dense<0.000000e+00> : vector<16x32xf32>
    %115 = tpu.matmul %114, %103, %cst_52 {dimension_numbers = #tpu.dot_dimension_numbers<[1], [0], [0], [1], [0, 0, 1, 1], [], []>} : vector<16x32xf32>, vector<32x32xf32>, vector<16x32xf32> -> vector<16x32xf32>
    %116 = vector.broadcast %104 : vector<1x32xf32> to vector<16x32xf32>
    %117 = arith.addf %115, %116 : vector<16x32xf32>
    %118 = arith.addf %117, %100 : vector<16x32xf32>
    %cst_53 = arith.constant dense<0.000000e+00> : vector<16xf32>
    %119 = vector.multi_reduction <add>, %118, %cst_53 [1] : vector<16x32xf32> to vector<16xf32>
    %120 = vector.shape_cast %119 : vector<16xf32> to vector<16x1xf32>
    %cst_54 = arith.constant 3.200000e+01 : f32
    %121 = vector.broadcast %cst_54 : f32 to vector<16x1xf32>
    %122 = arith.divf %120, %121 : vector<16x1xf32>
    %123 = vector.broadcast %122 : vector<16x1xf32> to vector<16x32xf32>
    %124 = arith.subf %118, %123 : vector<16x32xf32>
    %125 = arith.mulf %124, %124 : vector<16x32xf32>
    %cst_55 = arith.constant dense<0.000000e+00> : vector<16xf32>
    %126 = vector.multi_reduction <add>, %125, %cst_55 [1] : vector<16x32xf32> to vector<16xf32>
    %127 = vector.shape_cast %126 : vector<16xf32> to vector<16x1xf32>
    %cst_56 = arith.constant 3.200000e+01 : f32
    %128 = vector.broadcast %cst_56 : f32 to vector<16x1xf32>
    %129 = arith.divf %127, %128 : vector<16x1xf32>
    %cst_57 = arith.constant 9.99999974E-6 : f32
    %130 = vector.broadcast %cst_57 : f32 to vector<16x1xf32>
    %131 = arith.addf %129, %130 : vector<16x1xf32>
    %132 = math.rsqrt %131 : vector<16x1xf32>
    %133 = vector.broadcast %122 : vector<16x1xf32> to vector<16x32xf32>
    %134 = arith.subf %118, %133 : vector<16x32xf32>
    %135 = vector.broadcast %132 : vector<16x1xf32> to vector<16x32xf32>
    %136 = arith.mulf %134, %135 : vector<16x32xf32>
    %137 = vector.broadcast %105 : vector<1x32xf32> to vector<16x32xf32>
    %138 = arith.mulf %136, %137 : vector<16x32xf32>
    %139 = vector.broadcast %106 : vector<1x32xf32> to vector<16x32xf32>
    %140 = arith.addf %138, %139 : vector<16x32xf32>
    %c0_58 = arith.constant 0 : index
    %c0_59 = arith.constant 0 : index
    %141 = vector.load %arg13[%c0_58, %c0_59] : memref<32x192xf32, #tpu.memory_space<vmem>>, vector<32x192xf32>
    %c0_60 = arith.constant 0 : index
    %c0_61 = arith.constant 0 : index
    %142 = vector.load %arg14[%c0_60, %c0_61] : memref<64x32xf32, #tpu.memory_space<vmem>>, vector<64x32xf32>
    %c0_62 = arith.constant 0 : index
    %c0_63 = arith.constant 0 : index
    %143 = vector.load %arg15[%c0_62, %c0_63] : memref<1x32xf32, #tpu.memory_space<vmem>>, vector<1x32xf32>
    %c0_64 = arith.constant 0 : index
    %c0_65 = arith.constant 0 : index
    %144 = vector.load %arg16[%c0_64, %c0_65] : memref<1x32xf32, #tpu.memory_space<vmem>>, vector<1x32xf32>
    %cst_66 = arith.constant dense<0.000000e+00> : vector<16x192xf32>
    %145 = tpu.matmul %140, %141, %cst_66 {dimension_numbers = #tpu.dot_dimension_numbers<[1], [0], [0], [1], [0, 0, 1, 1], [], []>} : vector<16x32xf32>, vector<32x192xf32>, vector<16x192xf32> -> vector<16x192xf32>
    %146 = vector.extract_strided_slice %145 {offsets = [0, 0], sizes = [16, 64], strides = [1, 1]} : vector<16x192xf32> to vector<16x64xf32>
    %cst_67 = arith.constant 0.176776692 : f32
    %147 = vector.broadcast %cst_67 : f32 to vector<16x64xf32>
    %148 = arith.mulf %146, %147 : vector<16x64xf32>
    %149 = vector.extract_strided_slice %145 {offsets = [0, 64], sizes = [16, 64], strides = [1, 1]} : vector<16x192xf32> to vector<16x64xf32>
    %150 = vector.extract_strided_slice %145 {offsets = [0, 128], sizes = [16, 64], strides = [1, 1]} : vector<16x192xf32> to vector<16x64xf32>
    %151 = vector.extract_strided_slice %148 {offsets = [0, 0], sizes = [16, 16], strides = [1, 1]} : vector<16x64xf32> to vector<16x16xf32>
    %152 = vector.extract_strided_slice %149 {offsets = [0, 0], sizes = [16, 16], strides = [1, 1]} : vector<16x64xf32> to vector<16x16xf32>
    %153 = vector.extract_strided_slice %150 {offsets = [0, 0], sizes = [16, 16], strides = [1, 1]} : vector<16x64xf32> to vector<16x16xf32>
    %cst_68 = arith.constant dense<0.000000e+00> : vector<16x16xf32>
    %154 = tpu.matmul %151, %152, %cst_68 {dimension_numbers = #tpu.dot_dimension_numbers<[1], [1], [0], [0], [0, 0, 1, 0], [], []>} : vector<16x16xf32>, vector<16x16xf32>, vector<16x16xf32> -> vector<16x16xf32>
    %cst_69 = arith.constant dense<0xFF800000> : vector<16xf32>
    %155 = vector.multi_reduction <maximumf>, %154, %cst_69 [1] : vector<16x16xf32> to vector<16xf32>
    %156 = vector.shape_cast %155 : vector<16xf32> to vector<16x1xf32>
    %157 = vector.broadcast %156 : vector<16x1xf32> to vector<16x16xf32>
    %158 = arith.subf %154, %157 : vector<16x16xf32>
    %159 = math.exp %158 : vector<16x16xf32>
    %cst_70 = arith.constant dense<0.000000e+00> : vector<16xf32>
    %160 = vector.multi_reduction <add>, %159, %cst_70 [1] : vector<16x16xf32> to vector<16xf32>
    %161 = vector.shape_cast %160 : vector<16xf32> to vector<16x1xf32>
    %162 = tpu.reciprocal %161 {approx = true} : vector<16x1xf32> -> vector<16x1xf32>
    %163 = vector.broadcast %162 : vector<16x1xf32> to vector<16x16xf32>
    %164 = arith.mulf %159, %163 : vector<16x16xf32>
    %cst_71 = arith.constant dense<0.000000e+00> : vector<16x16xf32>
    %165 = tpu.matmul %164, %153, %cst_71 {dimension_numbers = #tpu.dot_dimension_numbers<[1], [0], [0], [1], [0, 0, 1, 1], [], []>} : vector<16x16xf32>, vector<16x16xf32>, vector<16x16xf32> -> vector<16x16xf32>
    %166 = vector.extract_strided_slice %148 {offsets = [0, 16], sizes = [16, 16], strides = [1, 1]} : vector<16x64xf32> to vector<16x16xf32>
    %167 = vector.extract_strided_slice %149 {offsets = [0, 16], sizes = [16, 16], strides = [1, 1]} : vector<16x64xf32> to vector<16x16xf32>
    %168 = vector.extract_strided_slice %150 {offsets = [0, 16], sizes = [16, 16], strides = [1, 1]} : vector<16x64xf32> to vector<16x16xf32>
    %cst_72 = arith.constant dense<0.000000e+00> : vector<16x16xf32>
    %169 = tpu.matmul %166, %167, %cst_72 {dimension_numbers = #tpu.dot_dimension_numbers<[1], [1], [0], [0], [0, 0, 1, 0], [], []>} : vector<16x16xf32>, vector<16x16xf32>, vector<16x16xf32> -> vector<16x16xf32>
    %cst_73 = arith.constant dense<0xFF800000> : vector<16xf32>
    %170 = vector.multi_reduction <maximumf>, %169, %cst_73 [1] : vector<16x16xf32> to vector<16xf32>
    %171 = vector.shape_cast %170 : vector<16xf32> to vector<16x1xf32>
    %172 = vector.broadcast %171 : vector<16x1xf32> to vector<16x16xf32>
    %173 = arith.subf %169, %172 : vector<16x16xf32>
    %174 = math.exp %173 : vector<16x16xf32>
    %cst_74 = arith.constant dense<0.000000e+00> : vector<16xf32>
    %175 = vector.multi_reduction <add>, %174, %cst_74 [1] : vector<16x16xf32> to vector<16xf32>
    %176 = vector.shape_cast %175 : vector<16xf32> to vector<16x1xf32>
    %177 = tpu.reciprocal %176 {approx = true} : vector<16x1xf32> -> vector<16x1xf32>
    %178 = vector.broadcast %177 : vector<16x1xf32> to vector<16x16xf32>
    %179 = arith.mulf %174, %178 : vector<16x16xf32>
    %cst_75 = arith.constant dense<0.000000e+00> : vector<16x16xf32>
    %180 = tpu.matmul %179, %168, %cst_75 {dimension_numbers = #tpu.dot_dimension_numbers<[1], [0], [0], [1], [0, 0, 1, 1], [], []>} : vector<16x16xf32>, vector<16x16xf32>, vector<16x16xf32> -> vector<16x16xf32>
    %181 = vector.extract_strided_slice %148 {offsets = [0, 32], sizes = [16, 16], strides = [1, 1]} : vector<16x64xf32> to vector<16x16xf32>
    %182 = vector.extract_strided_slice %149 {offsets = [0, 32], sizes = [16, 16], strides = [1, 1]} : vector<16x64xf32> to vector<16x16xf32>
    %183 = vector.extract_strided_slice %150 {offsets = [0, 32], sizes = [16, 16], strides = [1, 1]} : vector<16x64xf32> to vector<16x16xf32>
    %cst_76 = arith.constant dense<0.000000e+00> : vector<16x16xf32>
    %184 = tpu.matmul %181, %182, %cst_76 {dimension_numbers = #tpu.dot_dimension_numbers<[1], [1], [0], [0], [0, 0, 1, 0], [], []>} : vector<16x16xf32>, vector<16x16xf32>, vector<16x16xf32> -> vector<16x16xf32>
    %cst_77 = arith.constant dense<0xFF800000> : vector<16xf32>
    %185 = vector.multi_reduction <maximumf>, %184, %cst_77 [1] : vector<16x16xf32> to vector<16xf32>
    %186 = vector.shape_cast %185 : vector<16xf32> to vector<16x1xf32>
    %187 = vector.broadcast %186 : vector<16x1xf32> to vector<16x16xf32>
    %188 = arith.subf %184, %187 : vector<16x16xf32>
    %189 = math.exp %188 : vector<16x16xf32>
    %cst_78 = arith.constant dense<0.000000e+00> : vector<16xf32>
    %190 = vector.multi_reduction <add>, %189, %cst_78 [1] : vector<16x16xf32> to vector<16xf32>
    %191 = vector.shape_cast %190 : vector<16xf32> to vector<16x1xf32>
    %192 = tpu.reciprocal %191 {approx = true} : vector<16x1xf32> -> vector<16x1xf32>
    %193 = vector.broadcast %192 : vector<16x1xf32> to vector<16x16xf32>
    %194 = arith.mulf %189, %193 : vector<16x16xf32>
    %cst_79 = arith.constant dense<0.000000e+00> : vector<16x16xf32>
    %195 = tpu.matmul %194, %183, %cst_79 {dimension_numbers = #tpu.dot_dimension_numbers<[1], [0], [0], [1], [0, 0, 1, 1], [], []>} : vector<16x16xf32>, vector<16x16xf32>, vector<16x16xf32> -> vector<16x16xf32>
    %196 = vector.extract_strided_slice %148 {offsets = [0, 48], sizes = [16, 16], strides = [1, 1]} : vector<16x64xf32> to vector<16x16xf32>
    %197 = vector.extract_strided_slice %149 {offsets = [0, 48], sizes = [16, 16], strides = [1, 1]} : vector<16x64xf32> to vector<16x16xf32>
    %198 = vector.extract_strided_slice %150 {offsets = [0, 48], sizes = [16, 16], strides = [1, 1]} : vector<16x64xf32> to vector<16x16xf32>
    %cst_80 = arith.constant dense<0.000000e+00> : vector<16x16xf32>
    %199 = tpu.matmul %196, %197, %cst_80 {dimension_numbers = #tpu.dot_dimension_numbers<[1], [1], [0], [0], [0, 0, 1, 0], [], []>} : vector<16x16xf32>, vector<16x16xf32>, vector<16x16xf32> -> vector<16x16xf32>
    %cst_81 = arith.constant dense<0xFF800000> : vector<16xf32>
    %200 = vector.multi_reduction <maximumf>, %199, %cst_81 [1] : vector<16x16xf32> to vector<16xf32>
    %201 = vector.shape_cast %200 : vector<16xf32> to vector<16x1xf32>
    %202 = vector.broadcast %201 : vector<16x1xf32> to vector<16x16xf32>
    %203 = arith.subf %199, %202 : vector<16x16xf32>
    %204 = math.exp %203 : vector<16x16xf32>
    %cst_82 = arith.constant dense<0.000000e+00> : vector<16xf32>
    %205 = vector.multi_reduction <add>, %204, %cst_82 [1] : vector<16x16xf32> to vector<16xf32>
    %206 = vector.shape_cast %205 : vector<16xf32> to vector<16x1xf32>
    %207 = tpu.reciprocal %206 {approx = true} : vector<16x1xf32> -> vector<16x1xf32>
    %208 = vector.broadcast %207 : vector<16x1xf32> to vector<16x16xf32>
    %209 = arith.mulf %204, %208 : vector<16x16xf32>
    %cst_83 = arith.constant dense<0.000000e+00> : vector<16x16xf32>
    %210 = tpu.matmul %209, %198, %cst_83 {dimension_numbers = #tpu.dot_dimension_numbers<[1], [0], [0], [1], [0, 0, 1, 1], [], []>} : vector<16x16xf32>, vector<16x16xf32>, vector<16x16xf32> -> vector<16x16xf32>
    %211 = tpu.concatenate %165, %180, %195, %210 in 1 : vector<16x16xf32>, vector<16x16xf32>, vector<16x16xf32>, vector<16x16xf32> -> vector<16x64xf32>
    %cst_84 = arith.constant dense<0.000000e+00> : vector<16x32xf32>
    %212 = tpu.matmul %211, %142, %cst_84 {dimension_numbers = #tpu.dot_dimension_numbers<[1], [0], [0], [1], [0, 0, 1, 1], [], []>} : vector<16x64xf32>, vector<64x32xf32>, vector<16x32xf32> -> vector<16x32xf32>
    %213 = arith.addf %212, %140 : vector<16x32xf32>
    %cst_85 = arith.constant dense<0.000000e+00> : vector<16xf32>
    %214 = vector.multi_reduction <add>, %213, %cst_85 [1] : vector<16x32xf32> to vector<16xf32>
    %215 = vector.shape_cast %214 : vector<16xf32> to vector<16x1xf32>
    %cst_86 = arith.constant 3.200000e+01 : f32
    %216 = vector.broadcast %cst_86 : f32 to vector<16x1xf32>
    %217 = arith.divf %215, %216 : vector<16x1xf32>
    %218 = vector.broadcast %217 : vector<16x1xf32> to vector<16x32xf32>
    %219 = arith.subf %213, %218 : vector<16x32xf32>
    %220 = arith.mulf %219, %219 : vector<16x32xf32>
    %cst_87 = arith.constant dense<0.000000e+00> : vector<16xf32>
    %221 = vector.multi_reduction <add>, %220, %cst_87 [1] : vector<16x32xf32> to vector<16xf32>
    %222 = vector.shape_cast %221 : vector<16xf32> to vector<16x1xf32>
    %cst_88 = arith.constant 3.200000e+01 : f32
    %223 = vector.broadcast %cst_88 : f32 to vector<16x1xf32>
    %224 = arith.divf %222, %223 : vector<16x1xf32>
    %cst_89 = arith.constant 9.99999974E-6 : f32
    %225 = vector.broadcast %cst_89 : f32 to vector<16x1xf32>
    %226 = arith.addf %224, %225 : vector<16x1xf32>
    %227 = math.rsqrt %226 : vector<16x1xf32>
    %228 = vector.broadcast %217 : vector<16x1xf32> to vector<16x32xf32>
    %229 = arith.subf %213, %228 : vector<16x32xf32>
    %230 = vector.broadcast %227 : vector<16x1xf32> to vector<16x32xf32>
    %231 = arith.mulf %229, %230 : vector<16x32xf32>
    %232 = vector.broadcast %143 : vector<1x32xf32> to vector<16x32xf32>
    %233 = arith.mulf %231, %232 : vector<16x32xf32>
    %234 = vector.broadcast %144 : vector<1x32xf32> to vector<16x32xf32>
    %235 = arith.addf %233, %234 : vector<16x32xf32>
    %c0_90 = arith.constant 0 : index
    %c0_91 = arith.constant 0 : index
    %236 = vector.load %arg17[%c0_90, %c0_91] : memref<32x32xf32, #tpu.memory_space<vmem>>, vector<32x32xf32>
    %c0_92 = arith.constant 0 : index
    %c0_93 = arith.constant 0 : index
    %237 = vector.load %arg18[%c0_92, %c0_93] : memref<1x32xf32, #tpu.memory_space<vmem>>, vector<1x32xf32>
    %c0_94 = arith.constant 0 : index
    %c0_95 = arith.constant 0 : index
    %238 = vector.load %arg19[%c0_94, %c0_95] : memref<32x32xf32, #tpu.memory_space<vmem>>, vector<32x32xf32>
    %c0_96 = arith.constant 0 : index
    %c0_97 = arith.constant 0 : index
    %239 = vector.load %arg20[%c0_96, %c0_97] : memref<1x32xf32, #tpu.memory_space<vmem>>, vector<1x32xf32>
    %c0_98 = arith.constant 0 : index
    %c0_99 = arith.constant 0 : index
    %240 = vector.load %arg21[%c0_98, %c0_99] : memref<1x32xf32, #tpu.memory_space<vmem>>, vector<1x32xf32>
    %c0_100 = arith.constant 0 : index
    %c0_101 = arith.constant 0 : index
    %241 = vector.load %arg22[%c0_100, %c0_101] : memref<1x32xf32, #tpu.memory_space<vmem>>, vector<1x32xf32>
    %cst_102 = arith.constant dense<0.000000e+00> : vector<16x32xf32>
    %242 = tpu.matmul %235, %236, %cst_102 {dimension_numbers = #tpu.dot_dimension_numbers<[1], [0], [0], [1], [0, 0, 1, 1], [], []>} : vector<16x32xf32>, vector<32x32xf32>, vector<16x32xf32> -> vector<16x32xf32>
    %243 = vector.broadcast %237 : vector<1x32xf32> to vector<16x32xf32>
    %244 = arith.addf %242, %243 : vector<16x32xf32>
    %cst_103 = arith.constant 0.000000e+00 : f32
    %245 = vector.broadcast %cst_103 : f32 to vector<16x32xf32>
    %246 = arith.cmpf oge, %244, %245 : vector<16x32xf32>
    %cst_104 = arith.constant 0.000000e+00 : f32
    %247 = vector.broadcast %cst_104 : f32 to vector<16x32xf32>
    %248 = arith.mulf %247, %244 : vector<16x32xf32>
    %249 = arith.select %246, %244, %248 : vector<16x32xi1>, vector<16x32xf32>
    %cst_105 = arith.constant dense<0.000000e+00> : vector<16x32xf32>
    %250 = tpu.matmul %249, %238, %cst_105 {dimension_numbers = #tpu.dot_dimension_numbers<[1], [0], [0], [1], [0, 0, 1, 1], [], []>} : vector<16x32xf32>, vector<32x32xf32>, vector<16x32xf32> -> vector<16x32xf32>
    %251 = vector.broadcast %239 : vector<1x32xf32> to vector<16x32xf32>
    %252 = arith.addf %250, %251 : vector<16x32xf32>
    %253 = arith.addf %252, %235 : vector<16x32xf32>
    %cst_106 = arith.constant dense<0.000000e+00> : vector<16xf32>
    %254 = vector.multi_reduction <add>, %253, %cst_106 [1] : vector<16x32xf32> to vector<16xf32>
    %255 = vector.shape_cast %254 : vector<16xf32> to vector<16x1xf32>
    %cst_107 = arith.constant 3.200000e+01 : f32
    %256 = vector.broadcast %cst_107 : f32 to vector<16x1xf32>
    %257 = arith.divf %255, %256 : vector<16x1xf32>
    %258 = vector.broadcast %257 : vector<16x1xf32> to vector<16x32xf32>
    %259 = arith.subf %253, %258 : vector<16x32xf32>
    %260 = arith.mulf %259, %259 : vector<16x32xf32>
    %cst_108 = arith.constant dense<0.000000e+00> : vector<16xf32>
    %261 = vector.multi_reduction <add>, %260, %cst_108 [1] : vector<16x32xf32> to vector<16xf32>
    %262 = vector.shape_cast %261 : vector<16xf32> to vector<16x1xf32>
    %cst_109 = arith.constant 3.200000e+01 : f32
    %263 = vector.broadcast %cst_109 : f32 to vector<16x1xf32>
    %264 = arith.divf %262, %263 : vector<16x1xf32>
    %cst_110 = arith.constant 9.99999974E-6 : f32
    %265 = vector.broadcast %cst_110 : f32 to vector<16x1xf32>
    %266 = arith.addf %264, %265 : vector<16x1xf32>
    %267 = math.rsqrt %266 : vector<16x1xf32>
    %268 = vector.broadcast %257 : vector<16x1xf32> to vector<16x32xf32>
    %269 = arith.subf %253, %268 : vector<16x32xf32>
    %270 = vector.broadcast %267 : vector<16x1xf32> to vector<16x32xf32>
    %271 = arith.mulf %269, %270 : vector<16x32xf32>
    %272 = vector.broadcast %240 : vector<1x32xf32> to vector<16x32xf32>
    %273 = arith.mulf %271, %272 : vector<16x32xf32>
    %274 = vector.broadcast %241 : vector<1x32xf32> to vector<16x32xf32>
    %275 = arith.addf %273, %274 : vector<16x32xf32>
    %cst_111 = arith.constant 0.000000e+00 : f32
    %276 = vector.broadcast %cst_111 : f32 to vector<16x32xf32>
    %277 = arith.maximumf %275, %276 : vector<16x32xf32>
    %278 = math.absf %275 : vector<16x32xf32>
    %cst_112 = arith.constant 0.000000e+00 : f32
    %279 = vector.broadcast %cst_112 : f32 to vector<16x32xf32>
    %280 = arith.subf %279, %278 : vector<16x32xf32>
    %281 = math.exp %280 : vector<16x32xf32>
    %cst_113 = arith.constant 1.000000e+00 : f32
    %282 = vector.broadcast %cst_113 : f32 to vector<16x32xf32>
    %283 = arith.addf %282, %281 : vector<16x32xf32>
    %284 = math.log %283 : vector<16x32xf32>
    %285 = arith.addf %277, %284 : vector<16x32xf32>
    %c0_114 = arith.constant 0 : index
    %c0_115 = arith.constant 0 : index
    %286 = vector.load %arg23[%c0_114, %c0_115] : memref<16x32xf32, #tpu.memory_space<vmem>>, vector<16x32xf32>
    tpu.vector_store %arg23[%c0_114, %c0_115], %285 {strides = array<i32>} : memref<16x32xf32, #tpu.memory_space<vmem>>, vector<16x32xf32>,
    return
  }
}

</mosaic_0001>

<llo_original>
// kernel: tpu_custom_call.1
$region0: #{tpu_custom_call.1}
  #allocation0 [shape = 'u32[]', space=smem, size = 0x4, offset = 0x4, fixed_abs, tag = 'smem constant byte address 0x4 - core index']
  #allocation1 [shape = 'u32[72,128]{1,0:T(1,128)}', space=vmem, size = 0x9000, scoped, tag = 'internal scratch']
  %s0 = inlined_call_operand.hbm [shape: f32[16,16], index: 0, kind: input, shape index: {}]
  %s1 = inlined_call_operand.vmem [shape: f32[16,192], index: 1, kind: input, shape index: {}]
  %s2 = inlined_call_operand.vmem [shape: f32[64,32], index: 2, kind: input, shape index: {}]
  %s3 = inlined_call_operand.hbm [shape: f32[16,32], index: 3, kind: input, shape index: {}]
  %s4 = inlined_call_operand.vmem [shape: f32[1,32], index: 4, kind: input, shape index: {}]
  %s5 = inlined_call_operand.vmem [shape: f32[1,32], index: 5, kind: input, shape index: {}]
  %s6 = inlined_call_operand.vmem [shape: f32[1,32], index: 6, kind: input, shape index: {}]
  %s7 = inlined_call_operand.vmem [shape: f32[32,32], index: 7, kind: input, shape index: {}]
  %s8 = inlined_call_operand.vmem [shape: f32[1,32], index: 8, kind: input, shape index: {}]
  %s9 = inlined_call_operand.vmem [shape: f32[32,32], index: 9, kind: input, shape index: {}]
  %s10 = inlined_call_operand.vmem [shape: f32[1,32], index: 10, kind: input, shape index: {}]
  %s11 = inlined_call_operand.vmem [shape: f32[1,32], index: 11, kind: input, shape index: {}]
  %s12 = inlined_call_operand.vmem [shape: f32[1,32], index: 12, kind: input, shape index: {}]
  %s13 = inlined_call_operand.vmem [shape: f32[32,192], index: 13, kind: input, shape index: {}]
  %s14 = inlined_call_operand.vmem [shape: f32[64,32], index: 14, kind: input, shape index: {}]
  %s15 = inlined_call_operand.vmem [shape: f32[1,32], index: 15, kind: input, shape index: {}]
  %s16 = inlined_call_operand.vmem [shape: f32[1,32], index: 16, kind: input, shape index: {}]
  %s17 = inlined_call_operand.hbm [shape: f32[32,32], index: 17, kind: input, shape index: {}]
  %s18 = inlined_call_operand.vmem [shape: f32[1,32], index: 18, kind: input, shape index: {}]
  %s19 = inlined_call_operand.hbm [shape: f32[32,32], index: 19, kind: input, shape index: {}]
  %s20 = inlined_call_operand.vmem [shape: f32[1,32], index: 20, kind: input, shape index: {}]
  %s21 = inlined_call_operand.vmem [shape: f32[1,32], index: 21, kind: input, shape index: {}]
  %s22 = inlined_call_operand.vmem [shape: f32[1,32], index: 22, kind: input, shape index: {}]
  %s23 = inlined_call_operand.hbm [shape: f32[16,32], index: 23, kind: output, shape index: {}]
  %s24 = sld [smem:[#allocation0]]
  $region118: #{tpu_custom_call.1} parent=0
    _
  %s26 = ssub.s32 1, %s24
  %s27 = scalar_select 0, %s26, %s24
  $region1: #{tpu_custom_call.1} parent=0
    #allocation2 [shape = 'u8[8192]{0}', space=vmem, size = 0x2000, scoped, tag = 'input window, operand 0, single buffered']
    #allocation3 [shape = 's32[1]{0}', space=sflag, size = 0x4, scoped, tag = 'scoped memory for tpu_custom_call.1']
    #allocation4 [shape = 's32[1]{0}', space=sflag, size = 0x4, scoped, tag = 'scoped memory for tpu_custom_call.1']
    #allocation5 [shape = 'u8[8192]{0}', space=vmem, size = 0x2000, scoped, tag = 'input window, operand 3, single buffered']
    #allocation6 [shape = 's32[1]{0}', space=sflag, size = 0x4, scoped, tag = 'scoped memory for tpu_custom_call.1']
    #allocation7 [shape = 'u8[16384]{0}', space=vmem, size = 0x4000, scoped, tag = 'input window, operand 17, single buffered']
    #allocation8 [shape = 'u8[16384]{0}', space=vmem, size = 0x4000, scoped, tag = 'input window, operand 19, single buffered']
    #allocation9 [shape = 's32[1]{0}', space=sflag, size = 0x4, scoped, tag = 'scoped memory for tpu_custom_call.1']
    #allocation10 [shape = 'u8[8192]{0}', space=vmem, size = 0x2000, scoped, tag = 'output window, operand 0, single buffered']
    %28 = vsyncpa [#allocation3], 0
    %29 = vsyncpa [#allocation6], 0
    %30 = vsyncpa [#allocation9], 0
    %31 = vsyncpa [#allocation4], 0
    // Predicated region
    $region2: #{tpu_custom_call.1} parent=1 // pred_check
      _
    $region3: #{tpu_custom_call.1} parent=1 // pred_check_branch
      %33 = sbr.rel (0) target = $region5
    $region4: #{tpu_custom_call.1} parent=1 // pred_region
      %35 = vsyncadd [#allocation3], 0
      %s36 = sshll.u32 %s0, 4
      %s37 = int_to_ptr.hbm [resolvable:$true] %s36
      %s38 = sshll.u32 [#allocation2], 4
      %s39 = int_to_ptr.vmem [resolvable:$true] %s38
      %44 = dma.hbm_to_vmem [thread:$0]  %s37, 256, %s39, [#allocation3], 128, 128, 8
    $region5: #{tpu_custom_call.1} parent=1 // pred_fallthru
      _
    // Predicated region
    $region6: #{tpu_custom_call.1} parent=1 // pred_check
      _
    $region7: #{tpu_custom_call.1} parent=1 // pred_check_branch
      %46 = sbr.rel (0) target = $region9
    $region8: #{tpu_custom_call.1} parent=1 // pred_region
      _
    $region9: #{tpu_custom_call.1} parent=1 // pred_fallthru
      _
    // Predicated region
    $region10: #{tpu_custom_call.1} parent=1 // pred_check
      _
    $region11: #{tpu_custom_call.1} parent=1 // pred_check_branch
      %48 = sbr.rel (0) target = $region13
    $region12: #{tpu_custom_call.1} parent=1 // pred_region
      _
    $region13: #{tpu_custom_call.1} parent=1 // pred_fallthru
      _
    // Predicated region
    $region14: #{tpu_custom_call.1} parent=1 // pred_check
      _
    $region15: #{tpu_custom_call.1} parent=1 // pred_check_branch
      %50 = sbr.rel (0) target = $region17
    $region16: #{tpu_custom_call.1} parent=1 // pred_region
      %52 = vsyncadd [#allocation6], 0
      %s53 = sshll.u32 %s3, 4
      %s54 = int_to_ptr.hbm [resolvable:$true] %s53
      %s55 = sshll.u32 [#allocation5], 4
      %s56 = int_to_ptr.vmem [resolvable:$true] %s55
      %61 = dma.hbm_to_vmem [thread:$0]  %s54, 256, %s56, [#allocation6], 128, 128, 8
    $region17: #{tpu_custom_call.1} parent=1 // pred_fallthru
      _
    // Predicated region
    $region18: #{tpu_custom_call.1} parent=1 // pred_check
      _
    $region19: #{tpu_custom_call.1} parent=1 // pred_check_branch
      %63 = sbr.rel (0) target = $region21
    $region20: #{tpu_custom_call.1} parent=1 // pred_region
      _
    $region21: #{tpu_custom_call.1} parent=1 // pred_fallthru
      _
    // Predicated region
    $region22: #{tpu_custom_call.1} parent=1 // pred_check
      _
    $region23: #{tpu_custom_call.1} parent=1 // pred_check_branch
      %65 = sbr.rel (0) target = $region25
    $region24: #{tpu_custom_call.1} parent=1 // pred_region
      _
    $region25: #{tpu_custom_call.1} parent=1 // pred_fallthru
      _
    // Predicated region
    $region26: #{tpu_custom_call.1} parent=1 // pred_check
      _
    $region27: #{tpu_custom_call.1} parent=1 // pred_check_branch
      %67 = sbr.rel (0) target = $region29
    $region28: #{tpu_custom_call.1} parent=1 // pred_region
      _
    $region29: #{tpu_custom_call.1} parent=1 // pred_fallthru
      _
    // Predicated region
    $region30: #{tpu_custom_call.1} parent=1 // pred_check
      _
    $region31: #{tpu_custom_call.1} parent=1 // pred_check_branch
      %69 = sbr.rel (0) target = $region33
    $region32: #{tpu_custom_call.1} parent=1 // pred_region
      _
    $region33: #{tpu_custom_call.1} parent=1 // pred_fallthru
      _
    // Predicated region
    $region34: #{tpu_custom_call.1} parent=1 // pred_check
      _
    $region35: #{tpu_custom_call.1} parent=1 // pred_check_branch
      %71 = sbr.rel (0) target = $region37
    $region36: #{tpu_custom_call.1} parent=1 // pred_region
      _
    $region37: #{tpu_custom_call.1} parent=1 // pred_fallthru
      _
    // Predicated region
    $region38: #{tpu_custom_call.1} parent=1 // pred_check
      _
    $region39: #{tpu_custom_call.1} parent=1 // pred_check_branch
      %73 = sbr.rel (0) target = $region41
    $region40: #{tpu_custom_call.1} parent=1 // pred_region
      _
    $region41: #{tpu_custom_call.1} parent=1 // pred_fallthru
      _
    // Predicated region
    $region42: #{tpu_custom_call.1} parent=1 // pred_check
      _
    $region43: #{tpu_custom_call.1} parent=1 // pred_check_branch
      %75 = sbr.rel (0) target = $region45
    $region44: #{tpu_custom_call.1} parent=1 // pred_region
      _
    $region45: #{tpu_custom_call.1} parent=1 // pred_fallthru
      _
    // Predicated region
    $region46: #{tpu_custom_call.1} parent=1 // pred_check
      _
    $region47: #{tpu_custom_call.1} parent=1 // pred_check_branch
      %77 = sbr.rel (0) target = $region49
    $region48: #{tpu_custom_call.1} parent=1 // pred_region
      _
    $region49: #{tpu_custom_call.1} parent=1 // pred_fallthru
      _
    // Predicated region
    $region50: #{tpu_custom_call.1} parent=1 // pred_check
      _
    $region51: #{tpu_custom_call.1} parent=1 // pred_check_branch
      %79 = sbr.rel (0) target = $region53
    $region52: #{tpu_custom_call.1} parent=1 // pred_region
      _
    $region53: #{tpu_custom_call.1} parent=1 // pred_fallthru
      _
    // Predicated region
    $region54: #{tpu_custom_call.1} parent=1 // pred_check
      _
    $region55: #{tpu_custom_call.1} parent=1 // pred_check_branch
      %81 = sbr.rel (0) target = $region57
    $region56: #{tpu_custom_call.1} parent=1 // pred_region
      _
    $region57: #{tpu_custom_call.1} parent=1 // pred_fallthru
      _
    // Predicated region
    $region58: #{tpu_custom_call.1} parent=1 // pred_check
      _
    $region59: #{tpu_custom_call.1} parent=1 // pred_check_branch
      %83 = sbr.rel (0) target = $region61
    $region60: #{tpu_custom_call.1} parent=1 // pred_region
      _
    $region61: #{tpu_custom_call.1} parent=1 // pred_fallthru
      _
    // Predicated region
    $region62: #{tpu_custom_call.1} parent=1 // pred_check
      _
    $region63: #{tpu_custom_call.1} parent=1 // pred_check_branch
      %85 = sbr.rel (0) target = $region65
    $region64: #{tpu_custom_call.1} parent=1 // pred_region
      _
    $region65: #{tpu_custom_call.1} parent=1 // pred_fallthru
      _
    // Predicated region
    $region66: #{tpu_custom_call.1} parent=1 // pred_check
      _
    $region67: #{tpu_custom_call.1} parent=1 // pred_check_branch
      %87 = sbr.rel (0) target = $region69
    $region68: #{tpu_custom_call.1} parent=1 // pred_region
      _
    $region69: #{tpu_custom_call.1} parent=1 // pred_fallthru
      _
    // Predicated region
    $region70: #{tpu_custom_call.1} parent=1 // pred_check
      _
    $region71: #{tpu_custom_call.1} parent=1 // pred_check_branch
      %89 = sbr.rel (0) target = $region73
    $region72: #{tpu_custom_call.1} parent=1 // pred_region
      %91 = vsyncadd [#allocation6], 0
      %s92 = sshll.u32 %s17, 4
      %s93 = int_to_ptr.hbm [resolvable:$true] %s92
      %s94 = sshll.u32 [#allocation7], 4
      %s95 = int_to_ptr.vmem [resolvable:$true] %s94
      %100 = dma.hbm_to_vmem [thread:$0]  %s93, 512, %s95, [#allocation6], 128, 128, 8
    $region73: #{tpu_custom_call.1} parent=1 // pred_fallthru
      _
    // Predicated region
    $region74: #{tpu_custom_call.1} parent=1 // pred_check
      _
    $region75: #{tpu_custom_call.1} parent=1 // pred_check_branch
      %102 = sbr.rel (0) target = $region77
    $region76: #{tpu_custom_call.1} parent=1 // pred_region
      _
    $region77: #{tpu_custom_call.1} parent=1 // pred_fallthru
      _
    // Predicated region
    $region78: #{tpu_custom_call.1} parent=1 // pred_check
      _
    $region79: #{tpu_custom_call.1} parent=1 // pred_check_branch
      %104 = sbr.rel (0) target = $region81
    $region80: #{tpu_custom_call.1} parent=1 // pred_region
      %106 = vsyncadd [#allocation9], 0
      %s107 = sshll.u32 %s19, 4
      %s108 = int_to_ptr.hbm [resolvable:$true] %s107
      %s109 = sshll.u32 [#allocation8], 4
      %s110 = int_to_ptr.vmem [resolvable:$true] %s109
      %115 = dma.hbm_to_vmem [thread:$0]  %s108, 512, %s110, [#allocation9], 128, 128, 8
    $region81: #{tpu_custom_call.1} parent=1 // pred_fallthru
      _
    // Predicated region
    $region82: #{tpu_custom_call.1} parent=1 // pred_check
      _
    $region83: #{tpu_custom_call.1} parent=1 // pred_check_branch
      %117 = sbr.rel (0) target = $region85
    $region84: #{tpu_custom_call.1} parent=1 // pred_region
      _
    $region85: #{tpu_custom_call.1} parent=1 // pred_fallthru
      _
    // Predicated region
    $region86: #{tpu_custom_call.1} parent=1 // pred_check
      _
    $region87: #{tpu_custom_call.1} parent=1 // pred_check_branch
      %119 = sbr.rel (0) target = $region89
    $region88: #{tpu_custom_call.1} parent=1 // pred_region
      _
    $region89: #{tpu_custom_call.1} parent=1 // pred_fallthru
      _
    // Predicated region
    $region90: #{tpu_custom_call.1} parent=1 // pred_check
      _
    $region91: #{tpu_custom_call.1} parent=1 // pred_check_branch
      %121 = sbr.rel (0) target = $region93
    $region92: #{tpu_custom_call.1} parent=1 // pred_region
      _
    $region93: #{tpu_custom_call.1} parent=1 // pred_fallthru
      _
    // Predicated region
    $region94: #{tpu_custom_call.1} parent=1 // pred_check
      _
    $region95: #{tpu_custom_call.1} parent=1 // pred_check_branch
      %123 = sbr.rel (0) target = $region97
    $region96: #{tpu_custom_call.1} parent=1 // pred_region
      %125 = dma.done [#allocation3], 256
    $region97: #{tpu_custom_call.1} parent=1 // pred_fallthru
      _
    // Predicated region
    $region98: #{tpu_custom_call.1} parent=1 // pred_check
      _
    $region99: #{tpu_custom_call.1} parent=1 // pred_check_branch
      %127 = sbr.rel (0) target = $region101
    $region100: #{tpu_custom_call.1} parent=1 // pred_region
      %129 = dma.done [#allocation6], 256
    $region101: #{tpu_custom_call.1} parent=1 // pred_fallthru
      _
    // Predicated region
    $region102: #{tpu_custom_call.1} parent=1 // pred_check
      _
    $region103: #{tpu_custom_call.1} parent=1 // pred_check_branch
      %131 = sbr.rel (0) target = $region105
    $region104: #{tpu_custom_call.1} parent=1 // pred_region
      %133 = dma.done [#allocation6], 512
    $region105: #{tpu_custom_call.1} parent=1 // pred_fallthru
      _
    // Predicated region
    $region106: #{tpu_custom_call.1} parent=1 // pred_check
      _
    $region107: #{tpu_custom_call.1} parent=1 // pred_check_branch
      %135 = sbr.rel (0) target = $region109
    $region108: #{tpu_custom_call.1} parent=1 // pred_region
      %137 = dma.done [#allocation9], 512
    $region109: #{tpu_custom_call.1} parent=1 // pred_fallthru
      _
    %v138 = vld [vmem:[#allocation2] sm:$0xff]
    %v139 = vld [vmem:[#allocation2 + $0x8] sm:$0xff]
    %v140 = vld [vmem:[%s1] sm:$0xff]
    %v141 = vld [vmem:[%s1 + $0x8] sm:$0xff]
    %v142 = vld [vmem:[%s1 + $0x10] sm:$0xff]
    %v143 = vld [vmem:[%s1 + $0x18] sm:$0xff]
    %v144 = vld [vmem:[%s2] sm:$0xff]
    %v145 = vld [vmem:[%s2 + $0x8] sm:$0xff]
    %v146 = vld [vmem:[%s2 + $0x10] sm:$0xff]
    %v147 = vld [vmem:[%s2 + $0x18] sm:$0xff]
    %v148 = vld [vmem:[%s2 + $0x20] sm:$0xff]
    %v149 = vld [vmem:[%s2 + $0x28] sm:$0xff]
    %v150 = vld [vmem:[%s2 + $0x30] sm:$0xff]
    %v151 = vld [vmem:[%s2 + $0x38] sm:$0xff]
    %v152 = vld [vmem:[#allocation5] sm:$0xff]
    %v153 = vld [vmem:[#allocation5 + $0x8] sm:$0xff]
    %v154 = vld [vmem:[%s4] sm:$0x1]
    %v156 = vperm.slane %v154, 0
    %vm158 = vcmask 130048
    %v160 = vsel %vm158, %v138, 0
    %v163 = vsel %vm158, %v139, 0
    %165 = vmatpush.msra.mxu0 0.0
    %166 = vmatpush.msra.mxu0 0.0
    %167 = vmatpush.msra.mxu0 0.0
    %168 = vmatpush.msra.mxu0 0.0
    %169 = vmatpush.msra.mxu0 0.0
    %170 = vmatpush.msra.mxu0 0.0
    %171 = vmatpush.msra.mxu0 0.0
    %172 = vmatpush.msra.mxu0 0.0
    %173 = vmatpush.msra.mxu0 0.0
    %174 = vmatpush.msra.mxu0 0.0
    %175 = vmatpush.msra.mxu0 0.0
    %176 = vmatpush.msra.mxu0 0.0
    %177 = vmatpush.msra.mxu0 0.0
    %178 = vmatpush.msra.mxu0 0.0
    %179 = vmatpush.msra.mxu0 %v153
    %180 = vmatpush.msra.mxu0 %v152
    %181 = vmatmul.f32.gmra.mxu0 %v160
    %v182 = vpop.f32.mrf.mxu0
    %v183 = vadd.f32 %v156, %v182
    %184 = vmatmul.f32.gmra.mxu0 %v163
    %v185 = vpop.f32.mrf.mxu0
    %v186 = vadd.f32 %v156, %v185
    %187 = vdwg.mxu0
    %v188 = vld [vmem:[%s5] sm:$0x1]
    %v189 = vld [vmem:[%s6] sm:$0x1]
    %190 = vmatpush.msra.mxu0 0.0
    %191 = vmatpush.msra.mxu0 0.0
    %192 = vmatpush.msra.mxu0 0.0
    %193 = vmatpush.msra.mxu0 0.0
    %194 = vmatpush.msra.mxu0 0.0
    %195 = vmatpush.msra.mxu0 0.0
    %196 = vmatpush.msra.mxu0 0.0
    %197 = vmatpush.msra.mxu0 0.0
    %198 = vmatpush.msra.mxu0 0.0
    %199 = vmatpush.msra.mxu0 0.0
    %200 = vmatpush.msra.mxu0 0.0
    %201 = vmatpush.msra.mxu0 0.0
    %202 = vmatpush.msra.mxu0 0.0
    %203 = vmatpush.msra.mxu0 0.0
    %204 = vmatpush.msra.mxu0 %v142
    %205 = vmatpush.msra.mxu0 %v140
    %206 = vmatmul.f32.gmra.mxu0 %v160
    %v207 = vpop.f32.mrf.mxu0
    %v208 = vadd.f32 0.0, %v207
    %209 = vmatmul.f32.gmra.mxu0 %v163
    %v210 = vpop.f32.mrf.mxu0
    %v211 = vadd.f32 0.0, %v210
    %212 = vdwg.mxu0
    %213 = vmatpush.msra.mxu0 0.0
    %214 = vmatpush.msra.mxu0 0.0
    %215 = vmatpush.msra.mxu0 0.0
    %216 = vmatpush.msra.mxu0 0.0
    %217 = vmatpush.msra.mxu0 0.0
    %218 = vmatpush.msra.mxu0 0.0
    %219 = vmatpush.msra.mxu0 0.0
    %220 = vmatpush.msra.mxu0 0.0
    %221 = vmatpush.msra.mxu0 0.0
    %222 = vmatpush.msra.mxu0 0.0
    %223 = vmatpush.msra.mxu0 0.0
    %224 = vmatpush.msra.mxu0 0.0
    %225 = vmatpush.msra.mxu0 0.0
    %226 = vmatpush.msra.mxu0 0.0
    %227 = vmatpush.msra.mxu0 %v143
    %228 = vmatpush.msra.mxu0 %v141
    %229 = vmatmul.f32.gmra.mxu0 %v160
    %v230 = vpop.f32.mrf.mxu0
    %v231 = vadd.f32 0.0, %v230
    %232 = vmatmul.f32.gmra.mxu0 %v163
    %v233 = vpop.f32.mrf.mxu0
    %v234 = vadd.f32 0.0, %v233
    %235 = vdwg.mxu0
    %v236 = vmul.f32 %v208, 0.17677669
    %v237 = vmul.f32 %v211, 0.17677669
    %240 = vrot.lane.b32.xlu0 %v208, 64
    %v241 = vpop.permute.xlu0 %240
    %242 = vrot.lane.b32.xlu0 %v211, 64
    %v243 = vpop.permute.xlu0 %242
    %v245 = vsel %vm158, %v236, 0
    %v248 = vsel %vm158, %v237, 0
    %v250 = vsel %vm158, %v241, 0
    %v252 = vsel %vm158, %v243, 0
    %254 = vmatpush.xpose.msra.mxu0 0.0
    %255 = vmatpush.xpose.msra.mxu0 0.0
    %256 = vmatpush.xpose.msra.mxu0 0.0
    %257 = vmatpush.xpose.msra.mxu0 0.0
    %258 = vmatpush.xpose.msra.mxu0 0.0
    %259 = vmatpush.xpose.msra.mxu0 0.0
    %260 = vmatpush.xpose.msra.mxu0 0.0
    %261 = vmatpush.xpose.msra.mxu0 0.0
    %262 = vmatpush.xpose.msra.mxu0 0.0
    %263 = vmatpush.xpose.msra.mxu0 0.0
    %264 = vmatpush.xpose.msra.mxu0 0.0
    %265 = vmatpush.xpose.msra.mxu0 0.0
    %266 = vmatpush.xpose.msra.mxu0 0.0
    %267 = vmatpush.xpose.msra.mxu0 0.0
    %268 = vmatpush.xpose.msra.mxu0 %v252
    %269 = vmatpush.xpose.msra.mxu0 %v250
    %270 = vmatmul.f32.gmra.mxu0 %v245
    %v271 = vpop.f32.mrf.mxu0
    %v272 = vadd.f32 0.0, %v271
    %273 = vmatmul.f32.gmra.mxu0 %v248
    %v274 = vpop.f32.mrf.mxu0
    %v275 = vadd.f32 0.0, %v274
    %276 = vdwg.mxu0
    %v277 = vsel %vm158, %v272, -inf
    %278 = vmax.xlane.f32.xlu0 %v277
    %v279 = vpop.xlane.xlu0 %278
    %v280 = vsel %vm158, %v275, -inf
    %281 = vmax.xlane.f32.xlu0 %v280
    %v282 = vpop.xlane.xlu0 %281
    %v283 = vsub.f32 %v272, %v279
    %v284 = vsub.f32 %v275, %v282
    %v285 = vmul.f32 %v283, 1.442695
    %v286 = vpow.pop %v285
    %v287 = vmul.f32 %v284, 1.442695
    %v288 = vpow.pop %v287
    %v289 = vsel %vm158, %v286, 0.0
    %290 = vadd.xlane.f32.xlu0 %v289
    %v291 = vpop.xlane.xlu0 %290
    %v292 = vsel %vm158, %v288, 0.0
    %293 = vadd.xlane.f32.xlu0 %v292
    %v294 = vpop.xlane.xlu0 %293
    %v295 = vrcp.pop %v291
    %v296 = vrcp.pop %v294
    %v297 = vmul.f32 %v286, %v295
    %v298 = vmul.f32 %v288, %v296
    %v300 = vsel %vm158, %v297, 0
    %v303 = vsel %vm158, %v298, 0
    %305 = vmatpush.msra.mxu0 0.0
    %306 = vmatpush.msra.mxu0 0.0
    %307 = vmatpush.msra.mxu0 0.0
    %308 = vmatpush.msra.mxu0 0.0
    %309 = vmatpush.msra.mxu0 0.0
    %310 = vmatpush.msra.mxu0 0.0
    %311 = vmatpush.msra.mxu0 0.0
    %312 = vmatpush.msra.mxu0 0.0
    %313 = vmatpush.msra.mxu0 0.0
    %314 = vmatpush.msra.mxu0 0.0
    %315 = vmatpush.msra.mxu0 0.0
    %316 = vmatpush.msra.mxu0 0.0
    %317 = vmatpush.msra.mxu0 0.0
    %318 = vmatpush.msra.mxu0 0.0
    %319 = vmatpush.msra.mxu0 %v234
    %320 = vmatpush.msra.mxu0 %v231
    %321 = vmatmul.f32.gmra.mxu0 %v300
    %v322 = vpop.f32.mrf.mxu0
    %v323 = vadd.f32 0.0, %v322
    %324 = vmatmul.f32.gmra.mxu0 %v303
    %v325 = vpop.f32.mrf.mxu0
    %v326 = vadd.f32 0.0, %v325
    %327 = vdwg.mxu0
    %328 = vrot.lane.b32.xlu0 %v236, 112
    %v329 = vpop.permute.xlu0 %328
    %330 = vrot.lane.b32.xlu0 %v237, 112
    %v331 = vpop.permute.xlu0 %330
    %332 = vrot.lane.b32.xlu0 %v208, 48
    %v333 = vpop.permute.xlu0 %332
    %334 = vrot.lane.b32.xlu0 %v211, 48
    %v335 = vpop.permute.xlu0 %334
    %v336 = vsel %vm158, %v329, 0
    %v338 = vsel %vm158, %v331, 0
    %v340 = vsel %vm158, %v333, 0
    %v342 = vsel %vm158, %v335, 0
    %344 = vmatpush.xpose.msra.mxu0 0.0
    %345 = vmatpush.xpose.msra.mxu0 0.0
    %346 = vmatpush.xpose.msra.mxu0 0.0
    %347 = vmatpush.xpose.msra.mxu0 0.0
    %348 = vmatpush.xpose.msra.mxu0 0.0
    %349 = vmatpush.xpose.msra.mxu0 0.0
    %350 = vmatpush.xpose.msra.mxu0 0.0
    %351 = vmatpush.xpose.msra.mxu0 0.0
    %352 = vmatpush.xpose.msra.mxu0 0.0
    %353 = vmatpush.xpose.msra.mxu0 0.0
    %354 = vmatpush.xpose.msra.mxu0 0.0
    %355 = vmatpush.xpose.msra.mxu0 0.0
    %356 = vmatpush.xpose.msra.mxu0 0.0
    %357 = vmatpush.xpose.msra.mxu0 0.0
    %358 = vmatpush.xpose.msra.mxu0 %v342
    %359 = vmatpush.xpose.msra.mxu0 %v340
    %360 = vmatmul.f32.gmra.mxu0 %v336
    %v361 = vpop.f32.mrf.mxu0
    %v362 = vadd.f32 0.0, %v361
    %363 = vmatmul.f32.gmra.mxu0 %v338
    %v364 = vpop.f32.mrf.mxu0
    %v365 = vadd.f32 0.0, %v364
    %366 = vdwg.mxu0
    %v367 = vsel %vm158, %v362, -inf
    %368 = vmax.xlane.f32.xlu0 %v367
    %v369 = vpop.xlane.xlu0 %368
    %v370 = vsel %vm158, %v365, -inf
    %371 = vmax.xlane.f32.xlu0 %v370
    %v372 = vpop.xlane.xlu0 %371
    %v373 = vsub.f32 %v362, %v369
    %v374 = vsub.f32 %v365, %v372
    %v375 = vmul.f32 %v373, 1.442695
    %v376 = vpow.pop %v375
    %v377 = vmul.f32 %v374, 1.442695
    %v378 = vpow.pop %v377
    %v379 = vsel %vm158, %v376, 0.0
    %380 = vadd.xlane.f32.xlu0 %v379
    %v381 = vpop.xlane.xlu0 %380
    %v382 = vsel %vm158, %v378, 0.0
    %383 = vadd.xlane.f32.xlu0 %v382
    %v384 = vpop.xlane.xlu0 %383
    %v385 = vrcp.pop %v381
    %v386 = vrcp.pop %v384
    %v387 = vmul.f32 %v376, %v385
    %v388 = vmul.f32 %v378, %v386
    %391 = vrot.lane.b32.xlu0 %v231, 112
    %v392 = vpop.permute.xlu0 %391
    %393 = vrot.lane.b32.xlu0 %v234, 112
    %v394 = vpop.permute.xlu0 %393
    %v398 = vsel %vm158, %v387, 0
    %v401 = vsel %vm158, %v388, 0
    %403 = vmatpush.msra.mxu0 0.0
    %404 = vmatpush.msra.mxu0 0.0
    %405 = vmatpush.msra.mxu0 0.0
    %406 = vmatpush.msra.mxu0 0.0
    %407 = vmatpush.msra.mxu0 0.0
    %408 = vmatpush.msra.mxu0 0.0
    %409 = vmatpush.msra.mxu0 0.0
    %410 = vmatpush.msra.mxu0 0.0
    %411 = vmatpush.msra.mxu0 0.0
    %412 = vmatpush.msra.mxu0 0.0
    %413 = vmatpush.msra.mxu0 0.0
    %414 = vmatpush.msra.mxu0 0.0
    %415 = vmatpush.msra.mxu0 0.0
    %416 = vmatpush.msra.mxu0 0.0
    %417 = vmatpush.msra.mxu0 %v394
    %418 = vmatpush.msra.mxu0 %v392
    %419 = vmatmul.f32.gmra.mxu0 %v398
    %v420 = vpop.f32.mrf.mxu0
    %v421 = vadd.f32 0.0, %v420
    %422 = vmatmul.f32.gmra.mxu0 %v401
    %v423 = vpop.f32.mrf.mxu0
    %v424 = vadd.f32 0.0, %v423
    %425 = vdwg.mxu0
    %426 = vrot.lane.b32.xlu0 %v236, 96
    %v427 = vpop.permute.xlu0 %426
    %428 = vrot.lane.b32.xlu0 %v237, 96
    %v429 = vpop.permute.xlu0 %428
    %430 = vrot.lane.b32.xlu0 %v208, 32
    %v431 = vpop.permute.xlu0 %430
    %432 = vrot.lane.b32.xlu0 %v211, 32
    %v433 = vpop.permute.xlu0 %432
    %v434 = vsel %vm158, %v427, 0
    %v436 = vsel %vm158, %v429, 0
    %v438 = vsel %vm158, %v431, 0
    %v440 = vsel %vm158, %v433, 0
    %442 = vmatpush.xpose.msra.mxu0 0.0
    %443 = vmatpush.xpose.msra.mxu0 0.0
    %444 = vmatpush.xpose.msra.mxu0 0.0
    %445 = vmatpush.xpose.msra.mxu0 0.0
    %446 = vmatpush.xpose.msra.mxu0 0.0
    %447 = vmatpush.xpose.msra.mxu0 0.0
    %448 = vmatpush.xpose.msra.mxu0 0.0
    %449 = vmatpush.xpose.msra.mxu0 0.0
    %450 = vmatpush.xpose.msra.mxu0 0.0
    %451 = vmatpush.xpose.msra.mxu0 0.0
    %452 = vmatpush.xpose.msra.mxu0 0.0
    %453 = vmatpush.xpose.msra.mxu0 0.0
    %454 = vmatpush.xpose.msra.mxu0 0.0
    %455 = vmatpush.xpose.msra.mxu0 0.0
    %456 = vmatpush.xpose.msra.mxu0 %v440
    %457 = vmatpush.xpose.msra.mxu0 %v438
    %458 = vmatmul.f32.gmra.mxu0 %v434
    %v459 = vpop.f32.mrf.mxu0
    %v460 = vadd.f32 0.0, %v459
    %461 = vmatmul.f32.gmra.mxu0 %v436
    %v462 = vpop.f32.mrf.mxu0
    %v463 = vadd.f32 0.0, %v462
    %464 = vdwg.mxu0
    %v465 = vsel %vm158, %v460, -inf
    %466 = vmax.xlane.f32.xlu0 %v465
    %v467 = vpop.xlane.xlu0 %466
    %v468 = vsel %vm158, %v463, -inf
    %469 = vmax.xlane.f32.xlu0 %v468
    %v470 = vpop.xlane.xlu0 %469
    %v471 = vsub.f32 %v460, %v467
    %v472 = vsub.f32 %v463, %v470
    %v473 = vmul.f32 %v471, 1.442695
    %v474 = vpow.pop %v473
    %v475 = vmul.f32 %v472, 1.442695
    %v476 = vpow.pop %v475
    %v477 = vsel %vm158, %v474, 0.0
    %478 = vadd.xlane.f32.xlu0 %v477
    %v479 = vpop.xlane.xlu0 %478
    %v480 = vsel %vm158, %v476, 0.0
    %481 = vadd.xlane.f32.xlu0 %v480
    %v482 = vpop.xlane.xlu0 %481
    %v483 = vrcp.pop %v479
    %v484 = vrcp.pop %v482
    %v485 = vmul.f32 %v474, %v483
    %v486 = vmul.f32 %v476, %v484
    %487 = vrot.lane.b32.xlu0 %v231, 96
    %v488 = vpop.permute.xlu0 %487
    %489 = vrot.lane.b32.xlu0 %v234, 96
    %v490 = vpop.permute.xlu0 %489
    %v494 = vsel %vm158, %v485, 0
    %v497 = vsel %vm158, %v486, 0
    %499 = vmatpush.msra.mxu0 0.0
    %500 = vmatpush.msra.mxu0 0.0
    %501 = vmatpush.msra.mxu0 0.0
    %502 = vmatpush.msra.mxu0 0.0
    %503 = vmatpush.msra.mxu0 0.0
    %504 = vmatpush.msra.mxu0 0.0
    %505 = vmatpush.msra.mxu0 0.0
    %506 = vmatpush.msra.mxu0 0.0
    %507 = vmatpush.msra.mxu0 0.0
    %508 = vmatpush.msra.mxu0 0.0
    %509 = vmatpush.msra.mxu0 0.0
    %510 = vmatpush.msra.mxu0 0.0
    %511 = vmatpush.msra.mxu0 0.0
    %512 = vmatpush.msra.mxu0 0.0
    %513 = vmatpush.msra.mxu0 %v490
    %514 = vmatpush.msra.mxu0 %v488
    %515 = vmatmul.f32.gmra.mxu0 %v494
    %v516 = vpop.f32.mrf.mxu0
    %v517 = vadd.f32 0.0, %v516
    %518 = vmatmul.f32.gmra.mxu0 %v497
    %v519 = vpop.f32.mrf.mxu0
    %v520 = vadd.f32 0.0, %v519
    %521 = vdwg.mxu0
    %522 = vrot.lane.b32.xlu0 %v236, 80
    %v523 = vpop.permute.xlu0 %522
    %524 = vrot.lane.b32.xlu0 %v237, 80
    %v525 = vpop.permute.xlu0 %524
    %526 = vrot.lane.b32.xlu0 %v208, 16
    %v527 = vpop.permute.xlu0 %526
    %528 = vrot.lane.b32.xlu0 %v211, 16
    %v529 = vpop.permute.xlu0 %528
    %v530 = vsel %vm158, %v523, 0
    %v532 = vsel %vm158, %v525, 0
    %v534 = vsel %vm158, %v527, 0
    %v536 = vsel %vm158, %v529, 0
    %538 = vmatpush.xpose.msra.mxu0 0.0
    %539 = vmatpush.xpose.msra.mxu0 0.0
    %540 = vmatpush.xpose.msra.mxu0 0.0
    %541 = vmatpush.xpose.msra.mxu0 0.0
    %542 = vmatpush.xpose.msra.mxu0 0.0
    %543 = vmatpush.xpose.msra.mxu0 0.0
    %544 = vmatpush.xpose.msra.mxu0 0.0
    %545 = vmatpush.xpose.msra.mxu0 0.0
    %546 = vmatpush.xpose.msra.mxu0 0.0
    %547 = vmatpush.xpose.msra.mxu0 0.0
    %548 = vmatpush.xpose.msra.mxu0 0.0
    %549 = vmatpush.xpose.msra.mxu0 0.0
    %550 = vmatpush.xpose.msra.mxu0 0.0
    %551 = vmatpush.xpose.msra.mxu0 0.0
    %552 = vmatpush.xpose.msra.mxu0 %v536
    %553 = vmatpush.xpose.msra.mxu0 %v534
    %554 = vmatmul.f32.gmra.mxu0 %v530
    %v555 = vpop.f32.mrf.mxu0
    %v556 = vadd.f32 0.0, %v555
    %557 = vmatmul.f32.gmra.mxu0 %v532
    %v558 = vpop.f32.mrf.mxu0
    %v559 = vadd.f32 0.0, %v558
    %560 = vdwg.mxu0
    %v561 = vsel %vm158, %v556, -inf
    %562 = vmax.xlane.f32.xlu0 %v561
    %v563 = vpop.xlane.xlu0 %562
    %v564 = vsel %vm158, %v559, -inf
    %565 = vmax.xlane.f32.xlu0 %v564
    %v566 = vpop.xlane.xlu0 %565
    %v567 = vsub.f32 %v556, %v563
    %v568 = vsub.f32 %v559, %v566
    %v569 = vmul.f32 %v567, 1.442695
    %v570 = vpow.pop %v569
    %v571 = vmul.f32 %v568, 1.442695
    %v572 = vpow.pop %v571
    %v573 = vsel %vm158, %v570, 0.0
    %574 = vadd.xlane.f32.xlu0 %v573
    %v575 = vpop.xlane.xlu0 %574
    %v576 = vsel %vm158, %v572, 0.0
    %577 = vadd.xlane.f32.xlu0 %v576
    %v578 = vpop.xlane.xlu0 %577
    %v579 = vrcp.pop %v575
    %v580 = vrcp.pop %v578
    %v581 = vmul.f32 %v570, %v579
    %v582 = vmul.f32 %v572, %v580
    %583 = vrot.lane.b32.xlu0 %v231, 80
    %v584 = vpop.permute.xlu0 %583
    %585 = vrot.lane.b32.xlu0 %v234, 80
    %v586 = vpop.permute.xlu0 %585
    %v590 = vsel %vm158, %v581, 0
    %v593 = vsel %vm158, %v582, 0
    %595 = vmatpush.msra.mxu0 0.0
    %596 = vmatpush.msra.mxu0 0.0
    %597 = vmatpush.msra.mxu0 0.0
    %598 = vmatpush.msra.mxu0 0.0
    %599 = vmatpush.msra.mxu0 0.0
    %600 = vmatpush.msra.mxu0 0.0
    %601 = vmatpush.msra.mxu0 0.0
    %602 = vmatpush.msra.mxu0 0.0
    %603 = vmatpush.msra.mxu0 0.0
    %604 = vmatpush.msra.mxu0 0.0
    %605 = vmatpush.msra.mxu0 0.0
    %606 = vmatpush.msra.mxu0 0.0
    %607 = vmatpush.msra.mxu0 0.0
    %608 = vmatpush.msra.mxu0 0.0
    %609 = vmatpush.msra.mxu0 %v586
    %610 = vmatpush.msra.mxu0 %v584
    %611 = vmatmul.f32.gmra.mxu0 %v590
    %v612 = vpop.f32.mrf.mxu0
    %v613 = vadd.f32 0.0, %v612
    %614 = vmatmul.f32.gmra.mxu0 %v593
    %v615 = vpop.f32.mrf.mxu0
    %v616 = vadd.f32 0.0, %v615
    %617 = vdwg.mxu0
    %620 = vrot.lane.b32.xlu0 %v421, 16
    %v621 = vpop.permute.xlu0 %620
    %622 = vrot.lane.b32.xlu0 %v424, 16
    %v623 = vpop.permute.xlu0 %622
    %628 = vrot.lane.b32.xlu0 %v517, 32
    %v629 = vpop.permute.xlu0 %628
    %630 = vrot.lane.b32.xlu0 %v520, 32
    %v631 = vpop.permute.xlu0 %630
    %636 = vrot.lane.b32.xlu0 %v613, 48
    %v637 = vpop.permute.xlu0 %636
    %638 = vrot.lane.b32.xlu0 %v616, 48
    %v639 = vpop.permute.xlu0 %638
    %v642 = vsel %vm158, %v323, %v621
    %v643 = vsel %vm158, %v326, %v623
    %vm644 = vcmask 261120
    %v645 = vsel %vm644, %v642, %v629
    %v646 = vsel %vm644, %v643, %v631
    %vm647 = vcmask 392192
    %v648 = vsel %vm647, %v645, %v637
    %v649 = vsel %vm647, %v646, %v639
    %vm650 = vcmask 523264
    %v652 = vsel %vm650, %v648, 0
    %v655 = vsel %vm650, %v649, 0
    %657 = vmatpush.msra.mxu0 0.0
    %658 = vmatpush.msra.mxu0 0.0
    %659 = vmatpush.msra.mxu0 0.0
    %660 = vmatpush.msra.mxu0 0.0
    %661 = vmatpush.msra.mxu0 0.0
    %662 = vmatpush.msra.mxu0 0.0
    %663 = vmatpush.msra.mxu0 0.0
    %664 = vmatpush.msra.mxu0 0.0
    %665 = vmatpush.msra.mxu0 %v151
    %666 = vmatpush.msra.mxu0 %v150
    %667 = vmatpush.msra.mxu0 %v149
    %668 = vmatpush.msra.mxu0 %v148
    %669 = vmatpush.msra.mxu0 %v147
    %670 = vmatpush.msra.mxu0 %v146
    %671 = vmatpush.msra.mxu0 %v145
    %672 = vmatpush.msra.mxu0 %v144
    %673 = vmatmul.f32.gmra.mxu0 %v652
    %v674 = vpop.f32.mrf.mxu0
    %v675 = vadd.f32 %v183, %v674
    %676 = vmatmul.f32.gmra.mxu0 %v655
    %v677 = vpop.f32.mrf.mxu0
    %v678 = vadd.f32 %v186, %v677
    %679 = vdwg.mxu0
    %v680 = vsel %vm644, %v675, 0.0
    %681 = vadd.xlane.f32.xlu0 %v680
    %v682 = vpop.xlane.xlu0 %681
    %v683 = vsel %vm644, %v678, 0.0
    %684 = vadd.xlane.f32.xlu0 %v683
    %v685 = vpop.xlane.xlu0 %684
    %v686 = vrcp.pop 32.0
    %v687 = vmul.f32 32.0, %v686
    %v688 = vsub.f32 1.0, %v687
    %v689 = vmul.f32 %v686, %v688
    %v690 = vadd.f32 %v686, %v689
    %vm691 = vweird.f32 %v686
    %v692 = vsel %vm691, %v686, %v690
    %v693 = vmul.f32 %v682, %v692
    %v694 = vmul.f32 %v685, %v692
    %v695 = vsub.f32 %v675, %v693
    %v696 = vsub.f32 %v678, %v694
    %v697 = vmul.f32 %v695, %v695
    %v698 = vmul.f32 %v696, %v696
    %v699 = vsel %vm644, %v697, 0.0
    %700 = vadd.xlane.f32.xlu0 %v699
    %v701 = vpop.xlane.xlu0 %700
    %v702 = vsel %vm644, %v698, 0.0
    %703 = vadd.xlane.f32.xlu0 %v702
    %v704 = vpop.xlane.xlu0 %703
    %v705 = vmul.f32 %v701, %v692
    %v706 = vmul.f32 %v704, %v692
    %v707 = vadd.f32 %v705, 1e-05
    %v708 = vadd.f32 %v706, 1e-05
    %v709 = vrsqrt.pop %v707
    %v710 = vmul.f32 %v709, %v707
    %v711 = vmul.f32 %v710, %v709
    %v712 = vmul.f32 0.5, %v711
    %v713 = vsub.f32 1.5, %v712
    %v714 = vmul.f32 %v709, %v713
    %vm715 = vweird.f32 %v707
    %vm716 = vweird.f32 %v709
    %vm717 = vmor %vm715, %vm716
    %v718 = vsel %vm717, %v709, %v714
    %v719 = vrsqrt.pop %v708
    %v720 = vmul.f32 %v719, %v708
    %v721 = vmul.f32 %v720, %v719
    %v722 = vmul.f32 0.5, %v721
    %v723 = vsub.f32 1.5, %v722
    %v724 = vmul.f32 %v719, %v723
    %vm725 = vweird.f32 %v708
    %vm726 = vweird.f32 %v719
    %vm727 = vmor %vm725, %vm726
    %v728 = vsel %vm727, %v719, %v724
    %v729 = vmul.f32 %v695, %v718
    %v730 = vmul.f32 %v696, %v728
    %v732 = vperm.slane %v188, 0
    %v734 = vmul.f32 %v729, %v732
    %v735 = vmul.f32 %v730, %v732
    %v737 = vperm.slane %v189, 0
    %v739 = vadd.f32 %v734, %v737
    %v740 = vadd.f32 %v735, %v737
    %v741 = vld [vmem:[%s7] sm:$0xff]
    %v742 = vld [vmem:[%s7 + $0x8] sm:$0xff]
    %v743 = vld [vmem:[%s7 + $0x10] sm:$0xff]
    %v744 = vld [vmem:[%s7 + $0x18] sm:$0xff]
    %v745 = vld [vmem:[%s8] sm:$0x1]
    %v746 = vld [vmem:[%s9] sm:$0xff]
    %v747 = vld [vmem:[%s9 + $0x8] sm:$0xff]
    %v748 = vld [vmem:[%s9 + $0x10] sm:$0xff]
    %v749 = vld [vmem:[%s9 + $0x18] sm:$0xff]
    %v750 = vld [vmem:[%s10] sm:$0x1]
    %v751 = vld [vmem:[%s11] sm:$0x1]
    %v752 = vld [vmem:[%s12] sm:$0x1]
    %v754 = vperm.slane %v745, 0
    %v757 = vsel %vm644, %v739, 0
    %v760 = vsel %vm644, %v740, 0
    %762 = vmatpush.msra.mxu0 0.0
    %763 = vmatpush.msra.mxu0 0.0
    %764 = vmatpush.msra.mxu0 0.0
    %765 = vmatpush.msra.mxu0 0.0
    %766 = vmatpush.msra.mxu0 0.0
    %767 = vmatpush.msra.mxu0 0.0
    %768 = vmatpush.msra.mxu0 0.0
    %769 = vmatpush.msra.mxu0 0.0
    %770 = vmatpush.msra.mxu0 0.0
    %771 = vmatpush.msra.mxu0 0.0
    %772 = vmatpush.msra.mxu0 0.0
    %773 = vmatpush.msra.mxu0 0.0
    %774 = vmatpush.msra.mxu0 %v744
    %775 = vmatpush.msra.mxu0 %v743
    %776 = vmatpush.msra.mxu0 %v742
    %777 = vmatpush.msra.mxu0 %v741
    %778 = vmatmul.f32.gmra.mxu0 %v757
    %v779 = vpop.f32.mrf.mxu0
    %v780 = vadd.f32 %v754, %v779
    %781 = vmatmul.f32.gmra.mxu0 %v760
    %v782 = vpop.f32.mrf.mxu0
    %v783 = vadd.f32 %v754, %v782
    %784 = vdwg.mxu0
    %vm785 = vcmp.ge.f32.partialorder %v780, 0.0
    %vm786 = vcmp.ge.f32.partialorder %v783, 0.0
    %v787 = vmul.f32 %v780, 0.0
    %v788 = vmul.f32 %v783, 0.0
    %v789 = vsel %vm785, %v780, %v787
    %v790 = vsel %vm786, %v783, %v788
    %v792 = vperm.slane %v750, 0
    %v795 = vsel %vm644, %v789, 0
    %v798 = vsel %vm644, %v790, 0
    %800 = vmatpush.msra.mxu0 0.0
    %801 = vmatpush.msra.mxu0 0.0
    %802 = vmatpush.msra.mxu0 0.0
    %803 = vmatpush.msra.mxu0 0.0
    %804 = vmatpush.msra.mxu0 0.0
    %805 = vmatpush.msra.mxu0 0.0
    %806 = vmatpush.msra.mxu0 0.0
    %807 = vmatpush.msra.mxu0 0.0
    %808 = vmatpush.msra.mxu0 0.0
    %809 = vmatpush.msra.mxu0 0.0
    %810 = vmatpush.msra.mxu0 0.0
    %811 = vmatpush.msra.mxu0 0.0
    %812 = vmatpush.msra.mxu0 %v749
    %813 = vmatpush.msra.mxu0 %v748
    %814 = vmatpush.msra.mxu0 %v747
    %815 = vmatpush.msra.mxu0 %v746
    %816 = vmatmul.f32.gmra.mxu0 %v795
    %v817 = vpop.f32.mrf.mxu0
    %v818 = vadd.f32 %v792, %v817
    %819 = vmatmul.f32.gmra.mxu0 %v798
    %v820 = vpop.f32.mrf.mxu0
    %v821 = vadd.f32 %v792, %v820
    %822 = vdwg.mxu0
    %v823 = vadd.f32 %v818, %v739
    %v824 = vadd.f32 %v821, %v740
    %v825 = vsel %vm644, %v823, 0.0
    %826 = vadd.xlane.f32.xlu0 %v825
    %v827 = vpop.xlane.xlu0 %826
    %v828 = vsel %vm644, %v824, 0.0
    %829 = vadd.xlane.f32.xlu0 %v828
    %v830 = vpop.xlane.xlu0 %829
    %v831 = vmul.f32 %v827, %v692
    %v832 = vmul.f32 %v830, %v692
    %v833 = vsub.f32 %v823, %v831
    %v834 = vsub.f32 %v824, %v832
    %v835 = vmul.f32 %v833, %v833
    %v836 = vmul.f32 %v834, %v834
    %v837 = vsel %vm644, %v835, 0.0
    %838 = vadd.xlane.f32.xlu0 %v837
    %v839 = vpop.xlane.xlu0 %838
    %v840 = vsel %vm644, %v836, 0.0
    %841 = vadd.xlane.f32.xlu0 %v840
    %v842 = vpop.xlane.xlu0 %841
    %v843 = vmul.f32 %v839, %v692
    %v844 = vmul.f32 %v842, %v692
    %v845 = vadd.f32 %v843, 1e-05
    %v846 = vadd.f32 %v844, 1e-05
    %v847 = vrsqrt.pop %v845
    %v848 = vmul.f32 %v847, %v845
    %v849 = vmul.f32 %v848, %v847
    %v850 = vmul.f32 0.5, %v849
    %v851 = vsub.f32 1.5, %v850
    %v852 = vmul.f32 %v847, %v851
    %vm853 = vweird.f32 %v845
    %vm854 = vweird.f32 %v847
    %vm855 = vmor %vm853, %vm854
    %v856 = vsel %vm855, %v847, %v852
    %v857 = vrsqrt.pop %v846
    %v858 = vmul.f32 %v857, %v846
    %v859 = vmul.f32 %v858, %v857
    %v860 = vmul.f32 0.5, %v859
    %v861 = vsub.f32 1.5, %v860
    %v862 = vmul.f32 %v857, %v861
    %vm863 = vweird.f32 %v846
    %vm864 = vweird.f32 %v857
    %vm865 = vmor %vm863, %vm864
    %v866 = vsel %vm865, %v857, %v862
    %v867 = vmul.f32 %v833, %v856
    %v868 = vmul.f32 %v834, %v866
    %v870 = vperm.slane %v751, 0
    %v872 = vmul.f32 %v867, %v870
    %v873 = vmul.f32 %v868, %v870
    %v875 = vperm.slane %v752, 0
    %v877 = vadd.f32 %v872, %v875
    %v878 = vadd.f32 %v873, %v875
    %v879 = vld [vmem:[%s13] sm:$0xff]
    %v880 = vld [vmem:[%s13 + $0x8] sm:$0xff]
    %v881 = vld [vmem:[%s13 + $0x10] sm:$0xff]
    %v882 = vld [vmem:[%s13 + $0x18] sm:$0xff]
    %v883 = vld [vmem:[%s13 + $0x20] sm:$0xff]
    %v884 = vld [vmem:[%s13 + $0x28] sm:$0xff]
    %v885 = vld [vmem:[%s13 + $0x30] sm:$0xff]
    %v886 = vld [vmem:[%s13 + $0x38] sm:$0xff]
    %v887 = vld [vmem:[%s14] sm:$0xff]
    %v888 = vld [vmem:[%s14 + $0x8] sm:$0xff]
    %v889 = vld [vmem:[%s14 + $0x10] sm:$0xff]
    %v890 = vld [vmem:[%s14 + $0x18] sm:$0xff]
    %v891 = vld [vmem:[%s14 + $0x20] sm:$0xff]
    %v892 = vld [vmem:[%s14 + $0x28] sm:$0xff]
    %v893 = vld [vmem:[%s14 + $0x30] sm:$0xff]
    %v894 = vld [vmem:[%s14 + $0x38] sm:$0xff]
    %v895 = vld [vmem:[%s15] sm:$0x1]
    %v896 = vld [vmem:[%s16] sm:$0x1]
    %v898 = vsel %vm644, %v877, 0
    %v901 = vsel %vm644, %v878, 0
    %903 = vmatpush.msra.mxu0 0.0
    %904 = vmatpush.msra.mxu0 0.0
    %905 = vmatpush.msra.mxu0 0.0
    %906 = vmatpush.msra.mxu0 0.0
    %907 = vmatpush.msra.mxu0 0.0
    %908 = vmatpush.msra.mxu0 0.0
    %909 = vmatpush.msra.mxu0 0.0
    %910 = vmatpush.msra.mxu0 0.0
    %911 = vmatpush.msra.mxu0 0.0
    %912 = vmatpush.msra.mxu0 0.0
    %913 = vmatpush.msra.mxu0 0.0
    %914 = vmatpush.msra.mxu0 0.0
    %915 = vmatpush.msra.mxu0 %v885
    %916 = vmatpush.msra.mxu0 %v883
    %917 = vmatpush.msra.mxu0 %v881
    %918 = vmatpush.msra.mxu0 %v879
    %919 = vmatmul.f32.gmra.mxu0 %v898
    %v920 = vpop.f32.mrf.mxu0
    %v921 = vadd.f32 0.0, %v920
    %922 = vmatmul.f32.gmra.mxu0 %v901
    %v923 = vpop.f32.mrf.mxu0
    %v924 = vadd.f32 0.0, %v923
    %925 = vdwg.mxu0
    %926 = vmatpush.msra.mxu0 0.0
    %927 = vmatpush.msra.mxu0 0.0
    %928 = vmatpush.msra.mxu0 0.0
    %929 = vmatpush.msra.mxu0 0.0
    %930 = vmatpush.msra.mxu0 0.0
    %931 = vmatpush.msra.mxu0 0.0
    %932 = vmatpush.msra.mxu0 0.0
    %933 = vmatpush.msra.mxu0 0.0
    %934 = vmatpush.msra.mxu0 0.0
    %935 = vmatpush.msra.mxu0 0.0
    %936 = vmatpush.msra.mxu0 0.0
    %937 = vmatpush.msra.mxu0 0.0
    %938 = vmatpush.msra.mxu0 %v886
    %939 = vmatpush.msra.mxu0 %v884
    %940 = vmatpush.msra.mxu0 %v882
    %941 = vmatpush.msra.mxu0 %v880
    %942 = vmatmul.f32.gmra.mxu0 %v898
    %v943 = vpop.f32.mrf.mxu0
    %v944 = vadd.f32 0.0, %v943
    %945 = vmatmul.f32.gmra.mxu0 %v901
    %v946 = vpop.f32.mrf.mxu0
    %v947 = vadd.f32 0.0, %v946
    %948 = vdwg.mxu0
    %v949 = vmul.f32 %v921, 0.17677669
    %v950 = vmul.f32 %v924, 0.17677669
    %953 = vrot.lane.b32.xlu0 %v921, 64
    %v954 = vpop.permute.xlu0 %953
    %955 = vrot.lane.b32.xlu0 %v924, 64
    %v956 = vpop.permute.xlu0 %955
    %v958 = vsel %vm158, %v949, 0
    %v961 = vsel %vm158, %v950, 0
    %v963 = vsel %vm158, %v954, 0
    %v965 = vsel %vm158, %v956, 0
    %967 = vmatpush.xpose.msra.mxu0 0.0
    %968 = vmatpush.xpose.msra.mxu0 0.0
    %969 = vmatpush.xpose.msra.mxu0 0.0
    %970 = vmatpush.xpose.msra.mxu0 0.0
    %971 = vmatpush.xpose.msra.mxu0 0.0
    %972 = vmatpush.xpose.msra.mxu0 0.0
    %973 = vmatpush.xpose.msra.mxu0 0.0
    %974 = vmatpush.xpose.msra.mxu0 0.0
    %975 = vmatpush.xpose.msra.mxu0 0.0
    %976 = vmatpush.xpose.msra.mxu0 0.0
    %977 = vmatpush.xpose.msra.mxu0 0.0
    %978 = vmatpush.xpose.msra.mxu0 0.0
    %979 = vmatpush.xpose.msra.mxu0 0.0
    %980 = vmatpush.xpose.msra.mxu0 0.0
    %981 = vmatpush.xpose.msra.mxu0 %v965
    %982 = vmatpush.xpose.msra.mxu0 %v963
    %983 = vmatmul.f32.gmra.mxu0 %v958
    %v984 = vpop.f32.mrf.mxu0
    %v985 = vadd.f32 0.0, %v984
    %986 = vmatmul.f32.gmra.mxu0 %v961
    %v987 = vpop.f32.mrf.mxu0
    %v988 = vadd.f32 0.0, %v987
    %989 = vdwg.mxu0
    %v990 = vsel %vm158, %v985, -inf
    %991 = vmax.xlane.f32.xlu0 %v990
    %v992 = vpop.xlane.xlu0 %991
    %v993 = vsel %vm158, %v988, -inf
    %994 = vmax.xlane.f32.xlu0 %v993
    %v995 = vpop.xlane.xlu0 %994
    %v996 = vsub.f32 %v985, %v992
    %v997 = vsub.f32 %v988, %v995
    %v998 = vmul.f32 %v996, 1.442695
    %v999 = vpow.pop %v998
    %v1000 = vmul.f32 %v997, 1.442695
    %v1001 = vpow.pop %v1000
    %v1002 = vsel %vm158, %v999, 0.0
    %1003 = vadd.xlane.f32.xlu0 %v1002
    %v1004 = vpop.xlane.xlu0 %1003
    %v1005 = vsel %vm158, %v1001, 0.0
    %1006 = vadd.xlane.f32.xlu0 %v1005
    %v1007 = vpop.xlane.xlu0 %1006
    %v1008 = vrcp.pop %v1004
    %v1009 = vrcp.pop %v1007
    %v1010 = vmul.f32 %v999, %v1008
    %v1011 = vmul.f32 %v1001, %v1009
    %v1013 = vsel %vm158, %v1010, 0
    %v1016 = vsel %vm158, %v1011, 0
    %1018 = vmatpush.msra.mxu0 0.0
    %1019 = vmatpush.msra.mxu0 0.0
    %1020 = vmatpush.msra.mxu0 0.0
    %1021 = vmatpush.msra.mxu0 0.0
    %1022 = vmatpush.msra.mxu0 0.0
    %1023 = vmatpush.msra.mxu0 0.0
    %1024 = vmatpush.msra.mxu0 0.0
    %1025 = vmatpush.msra.mxu0 0.0
    %1026 = vmatpush.msra.mxu0 0.0
    %1027 = vmatpush.msra.mxu0 0.0
    %1028 = vmatpush.msra.mxu0 0.0
    %1029 = vmatpush.msra.mxu0 0.0
    %1030 = vmatpush.msra.mxu0 0.0
    %1031 = vmatpush.msra.mxu0 0.0
    %1032 = vmatpush.msra.mxu0 %v947
    %1033 = vmatpush.msra.mxu0 %v944
    %1034 = vmatmul.f32.gmra.mxu0 %v1013
    %v1035 = vpop.f32.mrf.mxu0
    %v1036 = vadd.f32 0.0, %v1035
    %1037 = vmatmul.f32.gmra.mxu0 %v1016
    %v1038 = vpop.f32.mrf.mxu0
    %v1039 = vadd.f32 0.0, %v1038
    %1040 = vdwg.mxu0
    %1041 = vrot.lane.b32.xlu0 %v949, 112
    %v1042 = vpop.permute.xlu0 %1041
    %1043 = vrot.lane.b32.xlu0 %v950, 112
    %v1044 = vpop.permute.xlu0 %1043
    %1045 = vrot.lane.b32.xlu0 %v921, 48
    %v1046 = vpop.permute.xlu0 %1045
    %1047 = vrot.lane.b32.xlu0 %v924, 48
    %v1048 = vpop.permute.xlu0 %1047
    %v1049 = vsel %vm158, %v1042, 0
    %v1051 = vsel %vm158, %v1044, 0
    %v1053 = vsel %vm158, %v1046, 0
    %v1055 = vsel %vm158, %v1048, 0
    %1057 = vmatpush.xpose.msra.mxu0 0.0
    %1058 = vmatpush.xpose.msra.mxu0 0.0
    %1059 = vmatpush.xpose.msra.mxu0 0.0
    %1060 = vmatpush.xpose.msra.mxu0 0.0
    %1061 = vmatpush.xpose.msra.mxu0 0.0
    %1062 = vmatpush.xpose.msra.mxu0 0.0
    %1063 = vmatpush.xpose.msra.mxu0 0.0
    %1064 = vmatpush.xpose.msra.mxu0 0.0
    %1065 = vmatpush.xpose.msra.mxu0 0.0
    %1066 = vmatpush.xpose.msra.mxu0 0.0
    %1067 = vmatpush.xpose.msra.mxu0 0.0
    %1068 = vmatpush.xpose.msra.mxu0 0.0
    %1069 = vmatpush.xpose.msra.mxu0 0.0
    %1070 = vmatpush.xpose.msra.mxu0 0.0
    %1071 = vmatpush.xpose.msra.mxu0 %v1055
    %1072 = vmatpush.xpose.msra.mxu0 %v1053
    %1073 = vmatmul.f32.gmra.mxu0 %v1049
    %v1074 = vpop.f32.mrf.mxu0
    %v1075 = vadd.f32 0.0, %v1074
    %1076 = vmatmul.f32.gmra.mxu0 %v1051
    %v1077 = vpop.f32.mrf.mxu0
    %v1078 = vadd.f32 0.0, %v1077
    %1079 = vdwg.mxu0
    %v1080 = vsel %vm158, %v1075, -inf
    %1081 = vmax.xlane.f32.xlu0 %v1080
    %v1082 = vpop.xlane.xlu0 %1081
    %v1083 = vsel %vm158, %v1078, -inf
    %1084 = vmax.xlane.f32.xlu0 %v1083
    %v1085 = vpop.xlane.xlu0 %1084
    %v1086 = vsub.f32 %v1075, %v1082
    %v1087 = vsub.f32 %v1078, %v1085
    %v1088 = vmul.f32 %v1086, 1.442695
    %v1089 = vpow.pop %v1088
    %v1090 = vmul.f32 %v1087, 1.442695
    %v1091 = vpow.pop %v1090
    %v1092 = vsel %vm158, %v1089, 0.0
    %1093 = vadd.xlane.f32.xlu0 %v1092
    %v1094 = vpop.xlane.xlu0 %1093
    %v1095 = vsel %vm158, %v1091, 0.0
    %1096 = vadd.xlane.f32.xlu0 %v1095
    %v1097 = vpop.xlane.xlu0 %1096
    %v1098 = vrcp.pop %v1094
    %v1099 = vrcp.pop %v1097
    %v1100 = vmul.f32 %v1089, %v1098
    %v1101 = vmul.f32 %v1091, %v1099
    %1104 = vrot.lane.b32.xlu0 %v944, 112
    %v1105 = vpop.permute.xlu0 %1104
    %1106 = vrot.lane.b32.xlu0 %v947, 112
    %v1107 = vpop.permute.xlu0 %1106
    %v1111 = vsel %vm158, %v1100, 0
    %v1114 = vsel %vm158, %v1101, 0
    %1116 = vmatpush.msra.mxu0 0.0
    %1117 = vmatpush.msra.mxu0 0.0
    %1118 = vmatpush.msra.mxu0 0.0
    %1119 = vmatpush.msra.mxu0 0.0
    %1120 = vmatpush.msra.mxu0 0.0
    %1121 = vmatpush.msra.mxu0 0.0
    %1122 = vmatpush.msra.mxu0 0.0
    %1123 = vmatpush.msra.mxu0 0.0
    %1124 = vmatpush.msra.mxu0 0.0
    %1125 = vmatpush.msra.mxu0 0.0
    %1126 = vmatpush.msra.mxu0 0.0
    %1127 = vmatpush.msra.mxu0 0.0
    %1128 = vmatpush.msra.mxu0 0.0
    %1129 = vmatpush.msra.mxu0 0.0
    %1130 = vmatpush.msra.mxu0 %v1107
    %1131 = vmatpush.msra.mxu0 %v1105
    %1132 = vmatmul.f32.gmra.mxu0 %v1111
    %v1133 = vpop.f32.mrf.mxu0
    %v1134 = vadd.f32 0.0, %v1133
    %1135 = vmatmul.f32.gmra.mxu0 %v1114
    %v1136 = vpop.f32.mrf.mxu0
    %v1137 = vadd.f32 0.0, %v1136
    %1138 = vdwg.mxu0
    %1139 = vrot.lane.b32.xlu0 %v949, 96
    %v1140 = vpop.permute.xlu0 %1139
    %1141 = vrot.lane.b32.xlu0 %v950, 96
    %v1142 = vpop.permute.xlu0 %1141
    %1143 = vrot.lane.b32.xlu0 %v921, 32
    %v1144 = vpop.permute.xlu0 %1143
    %1145 = vrot.lane.b32.xlu0 %v924, 32
    %v1146 = vpop.permute.xlu0 %1145
    %v1147 = vsel %vm158, %v1140, 0
    %v1149 = vsel %vm158, %v1142, 0
    %v1151 = vsel %vm158, %v1144, 0
    %v1153 = vsel %vm158, %v1146, 0
    %1155 = vmatpush.xpose.msra.mxu0 0.0
    %1156 = vmatpush.xpose.msra.mxu0 0.0
    %1157 = vmatpush.xpose.msra.mxu0 0.0
    %1158 = vmatpush.xpose.msra.mxu0 0.0
    %1159 = vmatpush.xpose.msra.mxu0 0.0
    %1160 = vmatpush.xpose.msra.mxu0 0.0
    %1161 = vmatpush.xpose.msra.mxu0 0.0
    %1162 = vmatpush.xpose.msra.mxu0 0.0
    %1163 = vmatpush.xpose.msra.mxu0 0.0
    %1164 = vmatpush.xpose.msra.mxu0 0.0
    %1165 = vmatpush.xpose.msra.mxu0 0.0
    %1166 = vmatpush.xpose.msra.mxu0 0.0
    %1167 = vmatpush.xpose.msra.mxu0 0.0
    %1168 = vmatpush.xpose.msra.mxu0 0.0
    %1169 = vmatpush.xpose.msra.mxu0 %v1153
    %1170 = vmatpush.xpose.msra.mxu0 %v1151
    %1171 = vmatmul.f32.gmra.mxu0 %v1147
    %v1172 = vpop.f32.mrf.mxu0
    %v1173 = vadd.f32 0.0, %v1172
    %1174 = vmatmul.f32.gmra.mxu0 %v1149
    %v1175 = vpop.f32.mrf.mxu0
    %v1176 = vadd.f32 0.0, %v1175
    %1177 = vdwg.mxu0
    %v1178 = vsel %vm158, %v1173, -inf
    %1179 = vmax.xlane.f32.xlu0 %v1178
    %v1180 = vpop.xlane.xlu0 %1179
    %v1181 = vsel %vm158, %v1176, -inf
    %1182 = vmax.xlane.f32.xlu0 %v1181
    %v1183 = vpop.xlane.xlu0 %1182
    %v1184 = vsub.f32 %v1173, %v1180
    %v1185 = vsub.f32 %v1176, %v1183
    %v1186 = vmul.f32 %v1184, 1.442695
    %v1187 = vpow.pop %v1186
    %v1188 = vmul.f32 %v1185, 1.442695
    %v1189 = vpow.pop %v1188
    %v1190 = vsel %vm158, %v1187, 0.0
    %1191 = vadd.xlane.f32.xlu0 %v1190
    %v1192 = vpop.xlane.xlu0 %1191
    %v1193 = vsel %vm158, %v1189, 0.0
    %1194 = vadd.xlane.f32.xlu0 %v1193
    %v1195 = vpop.xlane.xlu0 %1194
    %v1196 = vrcp.pop %v1192
    %v1197 = vrcp.pop %v1195
    %v1198 = vmul.f32 %v1187, %v1196
    %v1199 = vmul.f32 %v1189, %v1197
    %1200 = vrot.lane.b32.xlu0 %v944, 96
    %v1201 = vpop.permute.xlu0 %1200
    %1202 = vrot.lane.b32.xlu0 %v947, 96
    %v1203 = vpop.permute.xlu0 %1202
    %v1207 = vsel %vm158, %v1198, 0
    %v1210 = vsel %vm158, %v1199, 0
    %1212 = vmatpush.msra.mxu0 0.0
    %1213 = vmatpush.msra.mxu0 0.0
    %1214 = vmatpush.msra.mxu0 0.0
    %1215 = vmatpush.msra.mxu0 0.0
    %1216 = vmatpush.msra.mxu0 0.0
    %1217 = vmatpush.msra.mxu0 0.0
    %1218 = vmatpush.msra.mxu0 0.0
    %1219 = vmatpush.msra.mxu0 0.0
    %1220 = vmatpush.msra.mxu0 0.0
    %1221 = vmatpush.msra.mxu0 0.0
    %1222 = vmatpush.msra.mxu0 0.0
    %1223 = vmatpush.msra.mxu0 0.0
    %1224 = vmatpush.msra.mxu0 0.0
    %1225 = vmatpush.msra.mxu0 0.0
    %1226 = vmatpush.msra.mxu0 %v1203
    %1227 = vmatpush.msra.mxu0 %v1201
    %1228 = vmatmul.f32.gmra.mxu0 %v1207
    %v1229 = vpop.f32.mrf.mxu0
    %v1230 = vadd.f32 0.0, %v1229
    %1231 = vmatmul.f32.gmra.mxu0 %v1210
    %v1232 = vpop.f32.mrf.mxu0
    %v1233 = vadd.f32 0.0, %v1232
    %1234 = vdwg.mxu0
    %1235 = vrot.lane.b32.xlu0 %v949, 80
    %v1236 = vpop.permute.xlu0 %1235
    %1237 = vrot.lane.b32.xlu0 %v950, 80
    %v1238 = vpop.permute.xlu0 %1237
    %1239 = vrot.lane.b32.xlu0 %v921, 16
    %v1240 = vpop.permute.xlu0 %1239
    %1241 = vrot.lane.b32.xlu0 %v924, 16
    %v1242 = vpop.permute.xlu0 %1241
    %v1243 = vsel %vm158, %v1236, 0
    %v1245 = vsel %vm158, %v1238, 0
    %v1247 = vsel %vm158, %v1240, 0
    %v1249 = vsel %vm158, %v1242, 0
    %1251 = vmatpush.xpose.msra.mxu0 0.0
    %1252 = vmatpush.xpose.msra.mxu0 0.0
    %1253 = vmatpush.xpose.msra.mxu0 0.0
    %1254 = vmatpush.xpose.msra.mxu0 0.0
    %1255 = vmatpush.xpose.msra.mxu0 0.0
    %1256 = vmatpush.xpose.msra.mxu0 0.0
    %1257 = vmatpush.xpose.msra.mxu0 0.0
    %1258 = vmatpush.xpose.msra.mxu0 0.0
    %1259 = vmatpush.xpose.msra.mxu0 0.0
    %1260 = vmatpush.xpose.msra.mxu0 0.0
    %1261 = vmatpush.xpose.msra.mxu0 0.0
    %1262 = vmatpush.xpose.msra.mxu0 0.0
    %1263 = vmatpush.xpose.msra.mxu0 0.0
    %1264 = vmatpush.xpose.msra.mxu0 0.0
    %1265 = vmatpush.xpose.msra.mxu0 %v1249
    %1266 = vmatpush.xpose.msra.mxu0 %v1247
    %1267 = vmatmul.f32.gmra.mxu0 %v1243
    %v1268 = vpop.f32.mrf.mxu0
    %v1269 = vadd.f32 0.0, %v1268
    %1270 = vmatmul.f32.gmra.mxu0 %v1245
    %v1271 = vpop.f32.mrf.mxu0
    %v1272 = vadd.f32 0.0, %v1271
    %1273 = vdwg.mxu0
    %v1274 = vsel %vm158, %v1269, -inf
    %1275 = vmax.xlane.f32.xlu0 %v1274
    %v1276 = vpop.xlane.xlu0 %1275
    %v1277 = vsel %vm158, %v1272, -inf
    %1278 = vmax.xlane.f32.xlu0 %v1277
    %v1279 = vpop.xlane.xlu0 %1278
    %v1280 = vsub.f32 %v1269, %v1276
    %v1281 = vsub.f32 %v1272, %v1279
    %v1282 = vmul.f32 %v1280, 1.442695
    %v1283 = vpow.pop %v1282
    %v1284 = vmul.f32 %v1281, 1.442695
    %v1285 = vpow.pop %v1284
    %v1286 = vsel %vm158, %v1283, 0.0
    %1287 = vadd.xlane.f32.xlu0 %v1286
    %v1288 = vpop.xlane.xlu0 %1287
    %v1289 = vsel %vm158, %v1285, 0.0
    %1290 = vadd.xlane.f32.xlu0 %v1289
    %v1291 = vpop.xlane.xlu0 %1290
    %v1292 = vrcp.pop %v1288
    %v1293 = vrcp.pop %v1291
    %v1294 = vmul.f32 %v1283, %v1292
    %v1295 = vmul.f32 %v1285, %v1293
    %1296 = vrot.lane.b32.xlu0 %v944, 80
    %v1297 = vpop.permute.xlu0 %1296
    %1298 = vrot.lane.b32.xlu0 %v947, 80
    %v1299 = vpop.permute.xlu0 %1298
    %v1303 = vsel %vm158, %v1294, 0
    %v1306 = vsel %vm158, %v1295, 0
    %1308 = vmatpush.msra.mxu0 0.0
    %1309 = vmatpush.msra.mxu0 0.0
    %1310 = vmatpush.msra.mxu0 0.0
    %1311 = vmatpush.msra.mxu0 0.0
    %1312 = vmatpush.msra.mxu0 0.0
    %1313 = vmatpush.msra.mxu0 0.0
    %1314 = vmatpush.msra.mxu0 0.0
    %1315 = vmatpush.msra.mxu0 0.0
    %1316 = vmatpush.msra.mxu0 0.0
    %1317 = vmatpush.msra.mxu0 0.0
    %1318 = vmatpush.msra.mxu0 0.0
    %1319 = vmatpush.msra.mxu0 0.0
    %1320 = vmatpush.msra.mxu0 0.0
    %1321 = vmatpush.msra.mxu0 0.0
    %1322 = vmatpush.msra.mxu0 %v1299
    %1323 = vmatpush.msra.mxu0 %v1297
    %1324 = vmatmul.f32.gmra.mxu0 %v1303
    %v1325 = vpop.f32.mrf.mxu0
    %v1326 = vadd.f32 0.0, %v1325
    %1327 = vmatmul.f32.gmra.mxu0 %v1306
    %v1328 = vpop.f32.mrf.mxu0
    %v1329 = vadd.f32 0.0, %v1328
    %1330 = vdwg.mxu0
    %1333 = vrot.lane.b32.xlu0 %v1134, 16
    %v1334 = vpop.permute.xlu0 %1333
    %1335 = vrot.lane.b32.xlu0 %v1137, 16
    %v1336 = vpop.permute.xlu0 %1335
    %1341 = vrot.lane.b32.xlu0 %v1230, 32
    %v1342 = vpop.permute.xlu0 %1341
    %1343 = vrot.lane.b32.xlu0 %v1233, 32
    %v1344 = vpop.permute.xlu0 %1343
    %1349 = vrot.lane.b32.xlu0 %v1326, 48
    %v1350 = vpop.permute.xlu0 %1349
    %1351 = vrot.lane.b32.xlu0 %v1329, 48
    %v1352 = vpop.permute.xlu0 %1351
    %v1355 = vsel %vm158, %v1036, %v1334
    %v1356 = vsel %vm158, %v1039, %v1336
    %v1357 = vsel %vm644, %v1355, %v1342
    %v1358 = vsel %vm644, %v1356, %v1344
    %v1359 = vsel %vm647, %v1357, %v1350
    %v1360 = vsel %vm647, %v1358, %v1352
    %v1362 = vsel %vm650, %v1359, 0
    %v1365 = vsel %vm650, %v1360, 0
    %1367 = vmatpush.msra.mxu0 0.0
    %1368 = vmatpush.msra.mxu0 0.0
    %1369 = vmatpush.msra.mxu0 0.0
    %1370 = vmatpush.msra.mxu0 0.0
    %1371 = vmatpush.msra.mxu0 0.0
    %1372 = vmatpush.msra.mxu0 0.0
    %1373 = vmatpush.msra.mxu0 0.0
    %1374 = vmatpush.msra.mxu0 0.0
    %1375 = vmatpush.msra.mxu0 %v894
    %1376 = vmatpush.msra.mxu0 %v893
    %1377 = vmatpush.msra.mxu0 %v892
    %1378 = vmatpush.msra.mxu0 %v891
    %1379 = vmatpush.msra.mxu0 %v890
    %1380 = vmatpush.msra.mxu0 %v889
    %1381 = vmatpush.msra.mxu0 %v888
    %1382 = vmatpush.msra.mxu0 %v887
    %1383 = vmatmul.f32.gmra.mxu0 %v1362
    %v1384 = vpop.f32.mrf.mxu0
    %v1385 = vadd.f32 %v877, %v1384
    %1386 = vmatmul.f32.gmra.mxu0 %v1365
    %v1387 = vpop.f32.mrf.mxu0
    %v1388 = vadd.f32 %v878, %v1387
    %1389 = vdwg.mxu0
    %v1390 = vsel %vm644, %v1385, 0.0
    %1391 = vadd.xlane.f32.xlu0 %v1390
    %v1392 = vpop.xlane.xlu0 %1391
    %v1393 = vsel %vm644, %v1388, 0.0
    %1394 = vadd.xlane.f32.xlu0 %v1393
    %v1395 = vpop.xlane.xlu0 %1394
    %v1396 = vmul.f32 %v1392, %v692
    %v1397 = vmul.f32 %v1395, %v692
    %v1398 = vsub.f32 %v1385, %v1396
    %v1399 = vsub.f32 %v1388, %v1397
    %v1400 = vmul.f32 %v1398, %v1398
    %v1401 = vmul.f32 %v1399, %v1399
    %v1402 = vsel %vm644, %v1400, 0.0
    %1403 = vadd.xlane.f32.xlu0 %v1402
    %v1404 = vpop.xlane.xlu0 %1403
    %v1405 = vsel %vm644, %v1401, 0.0
    %1406 = vadd.xlane.f32.xlu0 %v1405
    %v1407 = vpop.xlane.xlu0 %1406
    %v1408 = vmul.f32 %v1404, %v692
    %v1409 = vmul.f32 %v1407, %v692
    %v1410 = vadd.f32 %v1408, 1e-05
    %v1411 = vadd.f32 %v1409, 1e-05
    %v1412 = vrsqrt.pop %v1410
    %v1413 = vmul.f32 %v1412, %v1410
    %v1414 = vmul.f32 %v1413, %v1412
    %v1415 = vmul.f32 0.5, %v1414
    %v1416 = vsub.f32 1.5, %v1415
    %v1417 = vmul.f32 %v1412, %v1416
    %vm1418 = vweird.f32 %v1410
    %vm1419 = vweird.f32 %v1412
    %vm1420 = vmor %vm1418, %vm1419
    %v1421 = vsel %vm1420, %v1412, %v1417
    %v1422 = vrsqrt.pop %v1411
    %v1423 = vmul.f32 %v1422, %v1411
    %v1424 = vmul.f32 %v1423, %v1422
    %v1425 = vmul.f32 0.5, %v1424
    %v1426 = vsub.f32 1.5, %v1425
    %v1427 = vmul.f32 %v1422, %v1426
    %vm1428 = vweird.f32 %v1411
    %vm1429 = vweird.f32 %v1422
    %vm1430 = vmor %vm1428, %vm1429
    %v1431 = vsel %vm1430, %v1422, %v1427
    %v1432 = vmul.f32 %v1398, %v1421
    %v1433 = vmul.f32 %v1399, %v1431
    %v1435 = vperm.slane %v895, 0
    %v1437 = vmul.f32 %v1432, %v1435
    %v1438 = vmul.f32 %v1433, %v1435
    %v1440 = vperm.slane %v896, 0
    %v1442 = vadd.f32 %v1437, %v1440
    %v1443 = vadd.f32 %v1438, %v1440
    %v1444 = vld [vmem:[#allocation7] sm:$0xff]
    %v1445 = vld [vmem:[#allocation7 + $0x8] sm:$0xff]
    %v1446 = vld [vmem:[#allocation7 + $0x10] sm:$0xff]
    %v1447 = vld [vmem:[#allocation7 + $0x18] sm:$0xff]
    %v1448 = vld [vmem:[%s18] sm:$0x1]
    %v1449 = vld [vmem:[#allocation8] sm:$0xff]
    %v1450 = vld [vmem:[#allocation8 + $0x8] sm:$0xff]
    %v1451 = vld [vmem:[#allocation8 + $0x10] sm:$0xff]
    %v1452 = vld [vmem:[#allocation8 + $0x18] sm:$0xff]
    %v1453 = vld [vmem:[%s20] sm:$0x1]
    %v1454 = vld [vmem:[%s21] sm:$0x1]
    %v1455 = vld [vmem:[%s22] sm:$0x1]
    %v1457 = vperm.slane %v1448, 0
    %v1460 = vsel %vm644, %v1442, 0
    %v1463 = vsel %vm644, %v1443, 0
    %1465 = vmatpush.msra.mxu0 0.0
    %1466 = vmatpush.msra.mxu0 0.0
    %1467 = vmatpush.msra.mxu0 0.0
    %1468 = vmatpush.msra.mxu0 0.0
    %1469 = vmatpush.msra.mxu0 0.0
    %1470 = vmatpush.msra.mxu0 0.0
    %1471 = vmatpush.msra.mxu0 0.0
    %1472 = vmatpush.msra.mxu0 0.0
    %1473 = vmatpush.msra.mxu0 0.0
    %1474 = vmatpush.msra.mxu0 0.0
    %1475 = vmatpush.msra.mxu0 0.0
    %1476 = vmatpush.msra.mxu0 0.0
    %1477 = vmatpush.msra.mxu0 %v1447
    %1478 = vmatpush.msra.mxu0 %v1446
    %1479 = vmatpush.msra.mxu0 %v1445
    %1480 = vmatpush.msra.mxu0 %v1444
    %1481 = vmatmul.f32.gmra.mxu0 %v1460
    %v1482 = vpop.f32.mrf.mxu0
    %v1483 = vadd.f32 %v1457, %v1482
    %1484 = vmatmul.f32.gmra.mxu0 %v1463
    %v1485 = vpop.f32.mrf.mxu0
    %v1486 = vadd.f32 %v1457, %v1485
    %1487 = vdwg.mxu0
    %vm1488 = vcmp.ge.f32.partialorder %v1483, 0.0
    %vm1489 = vcmp.ge.f32.partialorder %v1486, 0.0
    %v1490 = vmul.f32 %v1483, 0.0
    %v1491 = vmul.f32 %v1486, 0.0
    %v1492 = vsel %vm1488, %v1483, %v1490
    %v1493 = vsel %vm1489, %v1486, %v1491
    %v1495 = vperm.slane %v1453, 0
    %v1498 = vsel %vm644, %v1492, 0
    %v1501 = vsel %vm644, %v1493, 0
    %1503 = vmatpush.msra.mxu0 0.0
    %1504 = vmatpush.msra.mxu0 0.0
    %1505 = vmatpush.msra.mxu0 0.0
    %1506 = vmatpush.msra.mxu0 0.0
    %1507 = vmatpush.msra.mxu0 0.0
    %1508 = vmatpush.msra.mxu0 0.0
    %1509 = vmatpush.msra.mxu0 0.0
    %1510 = vmatpush.msra.mxu0 0.0
    %1511 = vmatpush.msra.mxu0 0.0
    %1512 = vmatpush.msra.mxu0 0.0
    %1513 = vmatpush.msra.mxu0 0.0
    %1514 = vmatpush.msra.mxu0 0.0
    %1515 = vmatpush.msra.mxu0 %v1452
    %1516 = vmatpush.msra.mxu0 %v1451
    %1517 = vmatpush.msra.mxu0 %v1450
    %1518 = vmatpush.msra.mxu0 %v1449
    %1519 = vmatmul.f32.gmra.mxu0 %v1498
    %v1520 = vpop.f32.mrf.mxu0
    %v1521 = vadd.f32 %v1495, %v1520
    %1522 = vmatmul.f32.gmra.mxu0 %v1501
    %v1523 = vpop.f32.mrf.mxu0
    %v1524 = vadd.f32 %v1495, %v1523
    %1525 = vdwg.mxu0
    %v1526 = vadd.f32 %v1521, %v1442
    %v1527 = vadd.f32 %v1524, %v1443
    %v1528 = vsel %vm644, %v1526, 0.0
    %1529 = vadd.xlane.f32.xlu0 %v1528
    %v1530 = vpop.xlane.xlu0 %1529
    %v1531 = vsel %vm644, %v1527, 0.0
    %1532 = vadd.xlane.f32.xlu0 %v1531
    %v1533 = vpop.xlane.xlu0 %1532
    %v1534 = vmul.f32 %v1530, %v692
    %v1535 = vmul.f32 %v1533, %v692
    %v1536 = vsub.f32 %v1526, %v1534
    %v1537 = vsub.f32 %v1527, %v1535
    %v1538 = vmul.f32 %v1536, %v1536
    %v1539 = vmul.f32 %v1537, %v1537
    %v1540 = vsel %vm644, %v1538, 0.0
    %1541 = vadd.xlane.f32.xlu0 %v1540
    %v1542 = vpop.xlane.xlu0 %1541
    %v1543 = vsel %vm644, %v1539, 0.0
    %1544 = vadd.xlane.f32.xlu0 %v1543
    %v1545 = vpop.xlane.xlu0 %1544
    %v1546 = vmul.f32 %v1542, %v692
    %v1547 = vmul.f32 %v1545, %v692
    %v1548 = vadd.f32 %v1546, 1e-05
    %v1549 = vadd.f32 %v1547, 1e-05
    %v1550 = vrsqrt.pop %v1548
    %v1551 = vmul.f32 %v1550, %v1548
    %v1552 = vmul.f32 %v1551, %v1550
    %v1553 = vmul.f32 0.5, %v1552
    %v1554 = vsub.f32 1.5, %v1553
    %v1555 = vmul.f32 %v1550, %v1554
    %vm1556 = vweird.f32 %v1548
    %vm1557 = vweird.f32 %v1550
    %vm1558 = vmor %vm1556, %vm1557
    %v1559 = vsel %vm1558, %v1550, %v1555
    %v1560 = vrsqrt.pop %v1549
    %v1561 = vmul.f32 %v1560, %v1549
    %v1562 = vmul.f32 %v1561, %v1560
    %v1563 = vmul.f32 0.5, %v1562
    %v1564 = vsub.f32 1.5, %v1563
    %v1565 = vmul.f32 %v1560, %v1564
    %vm1566 = vweird.f32 %v1549
    %vm1567 = vweird.f32 %v1560
    %vm1568 = vmor %vm1566, %vm1567
    %v1569 = vsel %vm1568, %v1560, %v1565
    %v1570 = vmul.f32 %v1536, %v1559
    %v1571 = vmul.f32 %v1537, %v1569
    %v1573 = vperm.slane %v1454, 0
    %v1575 = vmul.f32 %v1570, %v1573
    %v1576 = vmul.f32 %v1571, %v1573
    %v1578 = vperm.slane %v1455, 0
    %v1580 = vadd.f32 %v1575, %v1578
    %v1581 = vadd.f32 %v1576, %v1578
    %v1582 = vmax.f32 %v1580, 0.0
    %v1583 = vmax.f32 %v1581, 0.0
    %v1584 = vand.u32 2147483647, %v1580
    %v1585 = vand.u32 2147483647, %v1581
    %v1586 = vsub.f32 0.0, %v1584
    %v1587 = vsub.f32 0.0, %v1585
    %v1588 = vmul.f32 %v1586, 1.442695
    %v1589 = vpow.pop %v1588
    %v1590 = vmul.f32 %v1587, 1.442695
    %v1591 = vpow.pop %v1590
    %v1592 = vadd.f32 %v1589, 1.0
    %v1593 = vadd.f32 %v1591, 1.0
    %v1594 = vlog2.pop %v1592
    %v1595 = vmul.f32 %v1594, 0.6931472
    %v1596 = vlog2.pop %v1593
    %v1597 = vmul.f32 %v1596, 0.6931472
    %v1598 = vadd.f32 %v1582, %v1595
    %v1599 = vadd.f32 %v1583, %v1597
    %1600 = vst.msk [vmem:[#allocation10] sm:$0xff] %vm644, %v1598
    %1601 = vst.msk [vmem:[#allocation10 + $0x8] sm:$0xff] %vm644, %v1599
    // Predicated region
    $region110: #{tpu_custom_call.1} parent=1 // pred_check
      _
    $region111: #{tpu_custom_call.1} parent=1 // pred_check_branch
      %1603 = sbr.rel (0) target = $region113
    $region112: #{tpu_custom_call.1} parent=1 // pred_region
      %1605 = vsyncadd [#allocation4], 0
      %s1606 = sshll.u32 [#allocation10], 4
      %s1607 = int_to_ptr.vmem [resolvable:$true] %s1606
      %s1608 = sshll.u32 %s23, 4
      %s1609 = int_to_ptr.hbm [resolvable:$true] %s1608
      %1614 = dma.vmem_to_hbm [thread:$0]  %s1607, 256, %s1609, [#allocation4], 128, 128, 8
    $region113: #{tpu_custom_call.1} parent=1 // pred_fallthru
      _
    // Predicated region
    $region114: #{tpu_custom_call.1} parent=1 // pred_check
      _
    $region115: #{tpu_custom_call.1} parent=1 // pred_check_branch
      %1616 = sbr.rel (0) target = $region117
    $region116: #{tpu_custom_call.1} parent=1 // pred_region
      %1618 = dma.done [#allocation4], 256
    $region117: #{tpu_custom_call.1} parent=1 // pred_fallthru
      _
    %1619 = vsyncpa [#allocation3], 1
    %1620 = vsyncpa [#allocation6], 1
    %1621 = vsyncpa [#allocation9], 1
    %1622 = vsyncpa [#allocation4], 1

</llo_original>
